<compile_context>
chip_gen: v5e
topology: v5e:2x2
jax: 0.10.0
libtpu: 0.0.40
codegen_flags: <defaults>
</compile_context>

<pallas_src>
import jax
import jax.numpy as jnp
import numpy as np
from jax import lax
from jax.experimental import pallas as pl
from jax.experimental.pallas import tpu as pltpu


def _round_up(x: int, m: int) -> int:
    return ((x + m - 1) // m) * m


def _cdiv(a: int, b: int) -> int:
    return -(-a // b)


def _choose_s_block(S: int, B_tile: int, T: int) -> int:
    # Bound both the streamed feats block (S_blk, T, B_tile) and the chunk-vectorized
    # gold one-hot intermediate (S_blk, T*T, B_tile) to ~2 MiB; cap chunk at 64 steps.
    feats_step = T * B_tile * 4
    gold_step = T * T * B_tile * 4
    cap = (2 * 1024 * 1024) // max(feats_step, 1)
    cap = min(cap, max(1, (2 * 1024 * 1024) // max(gold_step, 1)), 64)
    cap = max(1, cap)
    if S <= cap:
        return S
    return _cdiv(S, _cdiv(S, cap))   # balanced chunks (minimal time padding)


def crf_loss_kernel(feats_ref, tags_ref, mask_ref, transflat_ref, exptT_ref,
                    tmax_ref, start_ref, end_ref, out_ref,
                    score_sc, gold_sc, prevtag_sc):
    S_blk, T, B = feats_ref.shape
    f32 = jnp.float32

    s_idx = pl.program_id(1)
    n_s = pl.num_programs(1)

    start_col = start_ref[...]                               # (T, 1)
    tags_c = tags_ref[...]                                   # (S_blk, 1, B) int32
    mask_c = mask_ref[...]                                   # (S_blk, 1, B); mask[0]==0 globally
    feats_c = feats_ref[...]                                 # (S_blk, T, B)

    tag_iota = lax.broadcasted_iota(jnp.int32, (1, T, B), 1)

    # ---- chunk 0: peel global step 0 into the resident-state init -------------
    @pl.when(s_idx == 0)
    def _():
        init = start_col + feats_ref[0]                      # (T, B)
        score_sc[...] = init
        gold_sc[...] = jnp.sum(
            jnp.where(tag_iota[0] == tags_c[0], init, 0.0), axis=0, keepdims=True)
        prevtag_sc[...] = jnp.zeros_like(prevtag_sc)

    # ---- gold (true-path) score: chunk-vectorized, off the serial chain -------
    emit_sel = jnp.sum(jnp.where(tag_iota == tags_c, feats_c, 0.0),
                       axis=1, keepdims=True)                # (S_blk, 1, B)
    gold_inc = jnp.sum(emit_sel * mask_c, axis=0)            # (1, B)

    trans_flat = transflat_ref[...]                          # (T*T, 1) row-major
    flat_iota = lax.broadcasted_iota(jnp.int32, (1, T * T, B), 1)

    # chunk-boundary transition pair (prev tag carried from the previous chunk).
    flat0 = prevtag_sc[...] * T + tags_c[0]                  # (1, B)
    sel0 = jnp.sum(jnp.where(flat_iota[0] == flat0, trans_flat, 0.0),
                   axis=0, keepdims=True)                    # (1, B)
    gold_inc = gold_inc + sel0 * mask_c[0]
    if S_blk > 1:
        flat_rest = tags_c[:-1] * T + tags_c[1:]             # (S_blk-1, 1, B)
        sel_rest = jnp.sum(
            jnp.where(flat_iota == flat_rest, trans_flat[None], 0.0),
            axis=1, keepdims=True)                           # (S_blk-1, 1, B)
        gold_inc = gold_inc + jnp.sum(sel_rest * mask_c[1:], axis=0)

    gold_sc[...] += gold_inc
    prevtag_sc[...] = tags_c[S_blk - 1]

    # ---- forward recurrence: serial over time within the chunk ----------------
    exp_transT = exptT_ref[...]                              # (T, T) = exp(trans - max).T
    trans_max = tmax_ref[...]                                # (1, 1)

    def step(t, score):
        feats_t = feats_ref[t]                               # (T, B)
        mask_t = mask_ref[t]                                 # (1, B)
        m = jnp.max(score, axis=0, keepdims=True)            # (1, B)
        p = jnp.exp(score - m)                               # (T, B)
        # NOTE: single shift (per-column score max + global trans max); exp(trans-max)
        # can underflow for huge transition dynamic ranges (e.g. -1e4 "banned" edges).
        lse = (jnp.log(jnp.dot(exp_transT, p, preferred_element_type=f32))
               + m + trans_max)
        return jnp.where(mask_t > 0, lse + feats_t, score)

    score = lax.fori_loop(0, S_blk, step, score_sc[...], unroll=min(8, S_blk))
    score_sc[...] = score

    # ---- finalize on the last sequence chunk ----------------------------------
    @pl.when(s_idx == n_s - 1)
    def _():
        sc = score + end_ref[...]                            # (T, B)
        m = jnp.max(sc, axis=0, keepdims=True)
        fwd = jnp.log(jnp.sum(jnp.exp(sc - m), axis=0, keepdims=True)) + m
        out_ref[...] = (fwd - gold_sc[...])[None]            # (1, 1, B) lane-dense


def crf_forward(feats, tags, mask, transitions, start_transitions, end_transitions):
    """Equivalent of Crf.forward (batch_first=False). Returns (B,) loss vector."""
    S, B, T = feats.shape
    f32 = jnp.float32

    # --- batch tiling: batch lives on LANES, prefer full 128-lane tiles ---
    B_tile = 128 if B > 128 else _round_up(B, 8)
    B_pad = _round_up(B, B_tile)
    nb = B_pad // B_tile

    # --- sequence chunking (streamed "arbitrary" grid axis) ---
    S_blk = _choose_s_block(S, B_tile, T)
    S_pad = _round_up(S, S_blk)
    ns = S_pad // S_blk

    mask_f = mask.astype(f32)
    # Global step 0 is peeled into the kernel's scratch init -> the kernel sees
    # mask[0] == 0 so the streamed loops leave score/gold untouched at t == 0.
    mask_k = mask_f.at[0].set(0.0)

    # (S, B, T) -> (S, T, B): one transpose in the wrapper; batch -> lanes.
    feats_p = jnp.pad(jnp.transpose(feats.astype(f32), (0, 2, 1)),
                      ((0, S_pad - S), (0, 0), (0, B_pad - B)))
    tags_p = jnp.pad(tags.astype(jnp.int32)[:, None, :],
                     ((0, S_pad - S), (0, 0), (0, B_pad - B)))
    mask_p = jnp.pad(mask_k[:, None, :],
                     ((0, S_pad - S), (0, 0), (0, B_pad - B)))

    # Grid-invariant transition tables, hoisted out of the kernel.
    trans = transitions.astype(f32)
    trans_max = jnp.max(trans).reshape(1, 1)
    exp_transT = jnp.exp(trans - trans_max).T                    # (T, T)
    trans_flat = trans.reshape(T * T, 1)                         # [i*T + j] = trans[i, j]
    start2 = start_transitions.astype(f32).reshape(T, 1)
    end2 = end_transitions.astype(f32).reshape(T, 1)

    # Gold end-transition term: one tiny gather in the wrapper (no in-kernel tracking).
    seq_ends = mask.astype(jnp.int32).sum(axis=0) - 1            # (B,)
    last_tags = tags.astype(jnp.int32)[seq_ends, jnp.arange(B)]
    end_gold = end_transitions.astype(f32)[last_tags]            # (B,)

    grid_spec = pltpu.PrefetchScalarGridSpec(
        num_scalar_prefetch=0,
        grid=(nb, ns),
        in_specs=[
            pl.BlockSpec((S_blk, T, B_tile), lambda b, s: (s, 0, b)),   # feats (S,T,B)
            pl.BlockSpec((S_blk, 1, B_tile), lambda b, s: (s, 0, b)),   # tags
            pl.BlockSpec((S_blk, 1, B_tile), lambda b, s: (s, 0, b)),   # mask
            pl.BlockSpec((T * T, 1), lambda b, s: (0, 0)),              # trans (flat)
            pl.BlockSpec((T, T), lambda b, s: (0, 0)),                  # exp(trans-max).T
            pl.BlockSpec((1, 1), lambda b, s: (0, 0)),                  # max(trans)
            pl.BlockSpec((T, 1), lambda b, s: (0, 0)),                  # start
            pl.BlockSpec((T, 1), lambda b, s: (0, 0)),                  # end
        ],
        out_specs=pl.BlockSpec((1, 1, B_tile), lambda b, s: (b, 0, 0)),
        scratch_shapes=[
            pltpu.VMEM((T, B_tile), jnp.float32),   # forward score (carried over s)
            pltpu.VMEM((1, B_tile), jnp.float32),   # gold score accumulator
            pltpu.VMEM((1, B_tile), jnp.int32),     # previous chunk's last tag
        ],
    )

    cost = pl.CostEstimate(
        flops=int(S_pad * B_pad * (4 * T * T + 8 * T)),
        transcendentals=int(S_pad * B_pad * 2 * T),
        bytes_accessed=int(feats_p.size * 4 + tags_p.size * 4 + mask_p.size * 4
                           + (2 * T * T + 3 * T + 1) * 4 + nb * B_tile * 4),
    )

    out = pl.pallas_call(
        crf_loss_kernel,
        out_shape=jax.ShapeDtypeStruct((nb, 1, B_tile), jnp.float32),
        grid_spec=grid_spec,
        compiler_params=pltpu.CompilerParams(
            dimension_semantics=("parallel", "arbitrary"),
            vmem_limit_bytes=32 * 1024 * 1024),
        cost_estimate=cost,
    )(feats_p, tags_p, mask_p, trans_flat, exp_transT, trans_max, start2, end2)

    return out.reshape(B_pad)[:B] - end_gold


def crf_forward_ref(feats, tags, mask, transitions, start_t, end_t):
    """Pure-JAX reference mirroring the PyTorch code exactly."""
    S, B, T = feats.shape
    mask_f = mask.astype(jnp.float32)
    # _forward_alg
    score = start_t + feats[0]
    for i in range(1, S):
        ns_ = score[:, :, None] + transitions[None, :, :] + feats[i][:, None, :]
        ns_ = jax.scipy.special.logsumexp(ns_, axis=1)
        score = jnp.where(mask[i][:, None] > 0, ns_, score)
    score = score + end_t
    forward_score = jax.scipy.special.logsumexp(score, axis=1)
    # _score_sentence
    ar = jnp.arange(B)
    g = start_t[tags[0]] + feats[0, ar, tags[0]]
    for i in range(1, S):
        g = g + feats[i, ar, tags[i]] * mask_f[i]
        g = g + transitions[tags[i - 1], tags[i]] * mask_f[i]
    seq_ends = mask.astype(jnp.int32).sum(axis=0) - 1
    last_tags = tags[seq_ends, ar]
    g = g + end_t[last_tags]
    return forward_score - g


if __name__ == "__main__":
    def run_case(S, B, T, key):
        ks = jax.random.split(key, 6)
        transitions = jax.random.normal(ks[0], (T, T), jnp.float32)
        start_t = 0.5 * jax.random.normal(ks[1], (T,), jnp.float32)
        end_t = 0.5 * jax.random.normal(ks[2], (T,), jnp.float32)
        feats = jax.random.normal(ks[3], (S, B, T), jnp.float32)
        tags = jax.random.randint(ks[4], (S, B), 0, T, jnp.int32)
        lengths = jax.random.randint(ks[5], (B,), 1, S + 1, jnp.int32)
        mask = (jnp.arange(S)[:, None] < lengths[None, :]).astype(jnp.int32)  # (S, B)

        loss = jax.block_until_ready(
            crf_forward(feats, tags, mask, transitions, start_t, end_t))
        loss_ref = crf_forward_ref(feats, tags, mask, transitions, start_t, end_t)
        np.testing.assert_allclose(np.asarray(loss), np.asarray(loss_ref),
                                   rtol=2e-4, atol=1e-3)

    key = jax.random.PRNGKey(0)
    k1, k2 = jax.random.split(key)
    run_case(S=8, B=4, T=8, key=k1)      # single time chunk, tiny batch
    run_case(S=100, B=12, T=8, key=k2)   # multi-chunk carry + time padding
    print("KERNEL_OK")
</pallas_src>

<mosaic_0001>
module attributes {stable_mosaic.version = 11 : i64} {
  func.func @crf_loss_kernel(%arg0: i32, %arg1: i32, %arg2: memref<8x8x8xf32, #tpu.memory_space<vmem>>, %arg3: memref<8x1x8xi32, #tpu.memory_space<vmem>>, %arg4: memref<8x1x8xf32, #tpu.memory_space<vmem>>, %arg5: memref<64x1xf32, #tpu.memory_space<vmem>>, %arg6: memref<8x8xf32, #tpu.memory_space<vmem>>, %arg7: memref<1x1xf32, #tpu.memory_space<vmem>>, %arg8: memref<8x1xf32, #tpu.memory_space<vmem>>, %arg9: memref<8x1xf32, #tpu.memory_space<vmem>>, %arg10: memref<1x1x8xf32, #tpu.memory_space<vmem>>, %arg11: memref<8x8xf32, #tpu.memory_space<vmem>>, %arg12: memref<1x8xf32, #tpu.memory_space<vmem>>, %arg13: memref<1x8xi32, #tpu.memory_space<vmem>>) attributes {dimension_semantics = [#tpu.dimension_semantics<parallel>, #tpu.dimension_semantics<arbitrary>], iteration_bounds = array<i64: 1, 1>, scalar_prefetch = 0 : i64, scratch_operands = 3 : i64, tpu.core_type = #tpu.core_type<tc>, window_params = [{transform_indices = @transform_0, window_bounds = array<i64: 8, 8, 8>}, {transform_indices = @transform_1, window_bounds = array<i64: 8, 1, 8>}, {transform_indices = @transform_2, window_bounds = array<i64: 8, 1, 8>}, {pipeline_mode = #tpu.pipeline_mode<synchronous>, transform_indices = @transform_3, window_bounds = array<i64: 64, 1>}, {pipeline_mode = #tpu.pipeline_mode<synchronous>, transform_indices = @transform_4, window_bounds = array<i64: 8, 8>}, {pipeline_mode = #tpu.pipeline_mode<synchronous>, transform_indices = @transform_5, window_bounds = array<i64: 1, 1>}, {pipeline_mode = #tpu.pipeline_mode<synchronous>, transform_indices = @transform_6, window_bounds = array<i64: 8, 1>}, {pipeline_mode = #tpu.pipeline_mode<synchronous>, transform_indices = @transform_7, window_bounds = array<i64: 8, 1>}, {transform_indices = @transform_8, window_bounds = array<i64: 1, 1, 8>}]} {
    %c0 = arith.constant 0 : index
    %c0_0 = arith.constant 0 : index
    %0 = vector.load %arg8[%c0, %c0_0] : memref<8x1xf32, #tpu.memory_space<vmem>>, vector<8x1xf32>
    %c0_1 = arith.constant 0 : index
    %c0_2 = arith.constant 0 : index
    %c0_3 = arith.constant 0 : index
    %1 = vector.load %arg3[%c0_1, %c0_2, %c0_3] : memref<8x1x8xi32, #tpu.memory_space<vmem>>, vector<8x1x8xi32>
    %c0_4 = arith.constant 0 : index
    %c0_5 = arith.constant 0 : index
    %c0_6 = arith.constant 0 : index
    %2 = vector.load %arg4[%c0_4, %c0_5, %c0_6] : memref<8x1x8xf32, #tpu.memory_space<vmem>>, vector<8x1x8xf32>
    %c0_7 = arith.constant 0 : index
    %c0_8 = arith.constant 0 : index
    %c0_9 = arith.constant 0 : index
    %3 = vector.load %arg2[%c0_7, %c0_8, %c0_9] : memref<8x8x8xf32, #tpu.memory_space<vmem>>, vector<8x8x8xf32>
    %4 = tpu.iota {dimensions = array<i32: 1>} : vector<1x8x8xi32>
    %c0_i32 = arith.constant 0 : i32
    %5 = arith.cmpi eq, %arg1, %c0_i32 : i32
    %6 = arith.extui %5 : i1 to i32
    %c0_i32_10 = arith.constant 0 : i32
    %7 = arith.cmpi ne, %6, %c0_i32_10 : i32
    scf.if %7 {
      %c0_97 = arith.constant 0 : index
      %c0_98 = arith.constant 0 : index
      %c0_99 = arith.constant 0 : index
      %254 = vector.load %arg2[%c0_97, %c0_98, %c0_99] : memref<8x8x8xf32, #tpu.memory_space<vmem>>, vector<1x8x8xf32>
      %255 = vector.shape_cast %254 : vector<1x8x8xf32> to vector<8x8xf32>
      %256 = vector.broadcast %0 : vector<8x1xf32> to vector<8x8xf32>
      %257 = arith.addf %256, %255 : vector<8x8xf32>
      %c0_100 = arith.constant 0 : index
      %c0_101 = arith.constant 0 : index
      %258 = vector.load %arg11[%c0_100, %c0_101] : memref<8x8xf32, #tpu.memory_space<vmem>>, vector<8x8xf32>
      tpu.vector_store %arg11[%c0_100, %c0_101], %257 {strides = array<i32>} : memref<8x8xf32, #tpu.memory_space<vmem>>, vector<8x8xf32>,
      %259 = vector.shape_cast %4 : vector<1x8x8xi32> to vector<8x8xi32>
      %260 = vector.extract_strided_slice %1 {offsets = [0, 0, 0], sizes = [1, 1, 8], strides = [1, 1, 1]} : vector<8x1x8xi32> to vector<1x1x8xi32>
      %261 = vector.shape_cast %260 : vector<1x1x8xi32> to vector<1x8xi32>
      %262 = vector.broadcast %261 : vector<1x8xi32> to vector<8x8xi32>
      %263 = arith.cmpi eq, %259, %262 : vector<8x8xi32>
      %cst_102 = arith.constant 0.000000e+00 : f32
      %264 = vector.broadcast %cst_102 : f32 to vector<8x8xf32>
      %265 = arith.select %263, %257, %264 : vector<8x8xi1>, vector<8x8xf32>
      %cst_103 = arith.constant dense<0.000000e+00> : vector<8xf32>
      %266 = vector.multi_reduction <add>, %265, %cst_103 [0] : vector<8x8xf32> to vector<8xf32>
      %267 = vector.shape_cast %266 : vector<8xf32> to vector<1x8xf32>
      %c0_104 = arith.constant 0 : index
      %c0_105 = arith.constant 0 : index
      %268 = vector.load %arg12[%c0_104, %c0_105] : memref<1x8xf32, #tpu.memory_space<vmem>>, vector<1x8xf32>
      tpu.vector_store %arg12[%c0_104, %c0_105], %267 {strides = array<i32>} : memref<1x8xf32, #tpu.memory_space<vmem>>, vector<1x8xf32>,
      %c0_i32_106 = arith.constant 0 : i32
      %269 = vector.broadcast %c0_i32_106 : i32 to vector<1x8xi32>
      %c0_107 = arith.constant 0 : index
      %c0_108 = arith.constant 0 : index
      %270 = vector.load %arg13[%c0_107, %c0_108] : memref<1x8xi32, #tpu.memory_space<vmem>>, vector<1x8xi32>
      tpu.vector_store %arg13[%c0_107, %c0_108], %269 {strides = array<i32>} : memref<1x8xi32, #tpu.memory_space<vmem>>, vector<1x8xi32>,
    } else {
    }
    %8 = vector.broadcast %4 : vector<1x8x8xi32> to vector<8x8x8xi32>
    %9 = vector.broadcast %1 : vector<8x1x8xi32> to vector<8x8x8xi32>
    %10 = arith.cmpi eq, %8, %9 : vector<8x8x8xi32>
    %cst = arith.constant 0.000000e+00 : f32
    %11 = vector.broadcast %cst : f32 to vector<8x8x8xf32>
    %12 = arith.select %10, %3, %11 : vector<8x8x8xi1>, vector<8x8x8xf32>
    %cst_11 = arith.constant dense<0.000000e+00> : vector<8x8xf32>
    %13 = vector.multi_reduction <add>, %12, %cst_11 [1] : vector<8x8x8xf32> to vector<8x8xf32>
    %14 = vector.shape_cast %13 : vector<8x8xf32> to vector<8x1x8xf32>
    %15 = arith.mulf %14, %2 : vector<8x1x8xf32>
    %cst_12 = arith.constant dense<0.000000e+00> : vector<1x8xf32>
    %16 = vector.multi_reduction <add>, %15, %cst_12 [0] : vector<8x1x8xf32> to vector<1x8xf32>
    %c0_13 = arith.constant 0 : index
    %c0_14 = arith.constant 0 : index
    %17 = vector.load %arg5[%c0_13, %c0_14] : memref<64x1xf32, #tpu.memory_space<vmem>>, vector<64x1xf32>
    %18 = tpu.iota {dimensions = array<i32: 1>} : vector<1x64x8xi32>
    %c0_15 = arith.constant 0 : index
    %c0_16 = arith.constant 0 : index
    %19 = vector.load %arg13[%c0_15, %c0_16] : memref<1x8xi32, #tpu.memory_space<vmem>>, vector<1x8xi32>
    %c8_i32 = arith.constant 8 : i32
    %20 = vector.broadcast %c8_i32 : i32 to vector<1x8xi32>
    %21 = arith.muli %19, %20 : vector<1x8xi32>
    %22 = vector.extract_strided_slice %1 {offsets = [0, 0, 0], sizes = [1, 1, 8], strides = [1, 1, 1]} : vector<8x1x8xi32> to vector<1x1x8xi32>
    %23 = vector.shape_cast %22 : vector<1x1x8xi32> to vector<1x8xi32>
    %24 = arith.addi %21, %23 : vector<1x8xi32>
    %25 = vector.shape_cast %18 : vector<1x64x8xi32> to vector<64x8xi32>
    %26 = vector.broadcast %24 : vector<1x8xi32> to vector<64x8xi32>
    %27 = arith.cmpi eq, %25, %26 : vector<64x8xi32>
    %cst_17 = arith.constant 0.000000e+00 : f32
    %28 = vector.shape_cast %17 : vector<64x1xf32> to vector<64x1xf32>
    %29 = vector.broadcast %28 : vector<64x1xf32> to vector<64x8xf32>
    %30 = vector.broadcast %cst_17 : f32 to vector<64x8xf32>
    %31 = arith.select %27, %29, %30 : vector<64x8xi1>, vector<64x8xf32>
    %cst_18 = arith.constant dense<0.000000e+00> : vector<8xf32>
    %32 = vector.multi_reduction <add>, %31, %cst_18 [0] : vector<64x8xf32> to vector<8xf32>
    %33 = vector.shape_cast %32 : vector<8xf32> to vector<1x8xf32>
    %34 = vector.extract_strided_slice %2 {offsets = [0, 0, 0], sizes = [1, 1, 8], strides = [1, 1, 1]} : vector<8x1x8xf32> to vector<1x1x8xf32>
    %35 = vector.shape_cast %34 : vector<1x1x8xf32> to vector<1x8xf32>
    %36 = arith.mulf %33, %35 : vector<1x8xf32>
    %37 = arith.addf %16, %36 : vector<1x8xf32>
    %38 = vector.extract_strided_slice %1 {offsets = [0, 0, 0], sizes = [7, 1, 8], strides = [1, 1, 1]} : vector<8x1x8xi32> to vector<7x1x8xi32>
    %c8_i32_19 = arith.constant 8 : i32
    %39 = vector.broadcast %c8_i32_19 : i32 to vector<7x1x8xi32>
    %40 = arith.muli %38, %39 : vector<7x1x8xi32>
    %41 = vector.extract_strided_slice %1 {offsets = [1, 0, 0], sizes = [7, 1, 8], strides = [1, 1, 1]} : vector<8x1x8xi32> to vector<7x1x8xi32>
    %42 = arith.addi %40, %41 : vector<7x1x8xi32>
    %43 = vector.broadcast %18 : vector<1x64x8xi32> to vector<7x64x8xi32>
    %44 = vector.broadcast %42 : vector<7x1x8xi32> to vector<7x64x8xi32>
    %45 = arith.cmpi eq, %43, %44 : vector<7x64x8xi32>
    %46 = vector.shape_cast %17 : vector<64x1xf32> to vector<1x64x1xf32>
    %cst_20 = arith.constant 0.000000e+00 : f32
    %47 = vector.shape_cast %46 : vector<1x64x1xf32> to vector<1x64x1xf32>
    %48 = vector.broadcast %47 : vector<1x64x1xf32> to vector<7x64x8xf32>
    %49 = vector.broadcast %cst_20 : f32 to vector<7x64x8xf32>
    %50 = arith.select %45, %48, %49 : vector<7x64x8xi1>, vector<7x64x8xf32>
    %cst_21 = arith.constant dense<0.000000e+00> : vector<7x8xf32>
    %51 = vector.multi_reduction <add>, %50, %cst_21 [1] : vector<7x64x8xf32> to vector<7x8xf32>
    %52 = vector.shape_cast %51 : vector<7x8xf32> to vector<7x1x8xf32>
    %53 = vector.extract_strided_slice %2 {offsets = [1, 0, 0], sizes = [7, 1, 8], strides = [1, 1, 1]} : vector<8x1x8xf32> to vector<7x1x8xf32>
    %54 = arith.mulf %52, %53 : vector<7x1x8xf32>
    %cst_22 = arith.constant dense<0.000000e+00> : vector<1x8xf32>
    %55 = vector.multi_reduction <add>, %54, %cst_22 [0] : vector<7x1x8xf32> to vector<1x8xf32>
    %56 = arith.addf %37, %55 : vector<1x8xf32>
    %c0_23 = arith.constant 0 : index
    %c0_24 = arith.constant 0 : index
    %57 = vector.load %arg12[%c0_23, %c0_24] : memref<1x8xf32, #tpu.memory_space<vmem>>, vector<1x8xf32>
    %58 = arith.addf %57, %56 : vector<1x8xf32>
    %c0_25 = arith.constant 0 : index
    %c0_26 = arith.constant 0 : index
    %59 = vector.load %arg12[%c0_25, %c0_26] : memref<1x8xf32, #tpu.memory_space<vmem>>, vector<1x8xf32>
    tpu.vector_store %arg12[%c0_25, %c0_26], %58 {strides = array<i32>} : memref<1x8xf32, #tpu.memory_space<vmem>>, vector<1x8xf32>,
    %60 = vector.extract_strided_slice %1 {offsets = [7, 0, 0], sizes = [1, 1, 8], strides = [1, 1, 1]} : vector<8x1x8xi32> to vector<1x1x8xi32>
    %61 = vector.shape_cast %60 : vector<1x1x8xi32> to vector<1x8xi32>
    %c0_27 = arith.constant 0 : index
    %c0_28 = arith.constant 0 : index
    %62 = vector.load %arg13[%c0_27, %c0_28] : memref<1x8xi32, #tpu.memory_space<vmem>>, vector<1x8xi32>
    tpu.vector_store %arg13[%c0_27, %c0_28], %61 {strides = array<i32>} : memref<1x8xi32, #tpu.memory_space<vmem>>, vector<1x8xi32>,
    %c0_29 = arith.constant 0 : index
    %c0_30 = arith.constant 0 : index
    %63 = vector.load %arg6[%c0_29, %c0_30] : memref<8x8xf32, #tpu.memory_space<vmem>>, vector<8x8xf32>
    %c0_31 = arith.constant 0 : index
    %c0_32 = arith.constant 0 : index
    %64 = vector.load %arg7[%c0_31, %c0_32] : memref<1x1xf32, #tpu.memory_space<vmem>>, vector<1x1xf32>
    %c0_33 = arith.constant 0 : index
    %c0_34 = arith.constant 0 : index
    %65 = vector.load %arg11[%c0_33, %c0_34] : memref<8x8xf32, #tpu.memory_space<vmem>>, vector<8x8xf32>
    %c0_i32_35 = arith.constant 0 : i32
    %66 = arith.index_cast %c0_i32_35 : i32 to index
    %c0_36 = arith.constant 0 : index
    %c0_37 = arith.constant 0 : index
    %67 = vector.load %arg2[%66, %c0_36, %c0_37] : memref<8x8x8xf32, #tpu.memory_space<vmem>>, vector<1x8x8xf32>
    %68 = vector.shape_cast %67 : vector<1x8x8xf32> to vector<8x8xf32>
    %69 = arith.index_cast %c0_i32_35 : i32 to index
    %c0_38 = arith.constant 0 : index
    %c0_39 = arith.constant 0 : index
    %70 = vector.load %arg4[%69, %c0_38, %c0_39] : memref<8x1x8xf32, #tpu.memory_space<vmem>>, vector<1x1x8xf32>
    %71 = vector.shape_cast %70 : vector<1x1x8xf32> to vector<1x8xf32>
    %cst_40 = arith.constant dense<0xFF800000> : vector<8xf32>
    %72 = vector.multi_reduction <maximumf>, %65, %cst_40 [0] : vector<8x8xf32> to vector<8xf32>
    %73 = vector.shape_cast %72 : vector<8xf32> to vector<1x8xf32>
    %74 = vector.broadcast %73 : vector<1x8xf32> to vector<8x8xf32>
    %75 = arith.subf %65, %74 : vector<8x8xf32>
    %76 = math.exp %75 : vector<8x8xf32>
    %cst_41 = arith.constant dense<0.000000e+00> : vector<8x8xf32>
    %77 = tpu.matmul %63, %76, %cst_41 {dimension_numbers = #tpu.dot_dimension_numbers<[1], [0], [0], [1], [0, 0, 1, 1], [], []>} : vector<8x8xf32>, vector<8x8xf32>, vector<8x8xf32> -> vector<8x8xf32>
    %78 = math.log %77 : vector<8x8xf32>
    %79 = vector.broadcast %73 : vector<1x8xf32> to vector<8x8xf32>
    %80 = arith.addf %78, %79 : vector<8x8xf32>
    %81 = vector.broadcast %64 : vector<1x1xf32> to vector<8x8xf32>
    %82 = arith.addf %80, %81 : vector<8x8xf32>
    %cst_42 = arith.constant 0.000000e+00 : f32
    %83 = vector.broadcast %cst_42 : f32 to vector<1x8xf32>
    %84 = arith.cmpf ogt, %71, %83 : vector<1x8xf32>
    %85 = arith.addf %82, %68 : vector<8x8xf32>
    %86 = vector.shape_cast %84 : vector<1x8xi1> to vector<1x8xi1>
    %87 = vector.broadcast %86 : vector<1x8xi1> to vector<8x8xi1>
    %88 = arith.select %87, %85, %65 : vector<8x8xi1>, vector<8x8xf32>
    %c1_i32 = arith.constant 1 : i32
    %89 = arith.index_cast %c1_i32 : i32 to index
    %c0_43 = arith.constant 0 : index
    %c0_44 = arith.constant 0 : index
    %90 = vector.load %arg2[%89, %c0_43, %c0_44] : memref<8x8x8xf32, #tpu.memory_space<vmem>>, vector<1x8x8xf32>
    %91 = vector.shape_cast %90 : vector<1x8x8xf32> to vector<8x8xf32>
    %92 = arith.index_cast %c1_i32 : i32 to index
    %c0_45 = arith.constant 0 : index
    %c0_46 = arith.constant 0 : index
    %93 = vector.load %arg4[%92, %c0_45, %c0_46] : memref<8x1x8xf32, #tpu.memory_space<vmem>>, vector<1x1x8xf32>
    %94 = vector.shape_cast %93 : vector<1x1x8xf32> to vector<1x8xf32>
    %cst_47 = arith.constant dense<0xFF800000> : vector<8xf32>
    %95 = vector.multi_reduction <maximumf>, %88, %cst_47 [0] : vector<8x8xf32> to vector<8xf32>
    %96 = vector.shape_cast %95 : vector<8xf32> to vector<1x8xf32>
    %97 = vector.broadcast %96 : vector<1x8xf32> to vector<8x8xf32>
    %98 = arith.subf %88, %97 : vector<8x8xf32>
    %99 = math.exp %98 : vector<8x8xf32>
    %cst_48 = arith.constant dense<0.000000e+00> : vector<8x8xf32>
    %100 = tpu.matmul %63, %99, %cst_48 {dimension_numbers = #tpu.dot_dimension_numbers<[1], [0], [0], [1], [0, 0, 1, 1], [], []>} : vector<8x8xf32>, vector<8x8xf32>, vector<8x8xf32> -> vector<8x8xf32>
    %101 = math.log %100 : vector<8x8xf32>
    %102 = vector.broadcast %96 : vector<1x8xf32> to vector<8x8xf32>
    %103 = arith.addf %101, %102 : vector<8x8xf32>
    %104 = vector.broadcast %64 : vector<1x1xf32> to vector<8x8xf32>
    %105 = arith.addf %103, %104 : vector<8x8xf32>
    %cst_49 = arith.constant 0.000000e+00 : f32
    %106 = vector.broadcast %cst_49 : f32 to vector<1x8xf32>
    %107 = arith.cmpf ogt, %94, %106 : vector<1x8xf32>
    %108 = arith.addf %105, %91 : vector<8x8xf32>
    %109 = vector.shape_cast %107 : vector<1x8xi1> to vector<1x8xi1>
    %110 = vector.broadcast %109 : vector<1x8xi1> to vector<8x8xi1>
    %111 = arith.select %110, %108, %88 : vector<8x8xi1>, vector<8x8xf32>
    %c2_i32 = arith.constant 2 : i32
    %112 = arith.index_cast %c2_i32 : i32 to index
    %c0_50 = arith.constant 0 : index
    %c0_51 = arith.constant 0 : index
    %113 = vector.load %arg2[%112, %c0_50, %c0_51] : memref<8x8x8xf32, #tpu.memory_space<vmem>>, vector<1x8x8xf32>
    %114 = vector.shape_cast %113 : vector<1x8x8xf32> to vector<8x8xf32>
    %115 = arith.index_cast %c2_i32 : i32 to index
    %c0_52 = arith.constant 0 : index
    %c0_53 = arith.constant 0 : index
    %116 = vector.load %arg4[%115, %c0_52, %c0_53] : memref<8x1x8xf32, #tpu.memory_space<vmem>>, vector<1x1x8xf32>
    %117 = vector.shape_cast %116 : vector<1x1x8xf32> to vector<1x8xf32>
    %cst_54 = arith.constant dense<0xFF800000> : vector<8xf32>
    %118 = vector.multi_reduction <maximumf>, %111, %cst_54 [0] : vector<8x8xf32> to vector<8xf32>
    %119 = vector.shape_cast %118 : vector<8xf32> to vector<1x8xf32>
    %120 = vector.broadcast %119 : vector<1x8xf32> to vector<8x8xf32>
    %121 = arith.subf %111, %120 : vector<8x8xf32>
    %122 = math.exp %121 : vector<8x8xf32>
    %cst_55 = arith.constant dense<0.000000e+00> : vector<8x8xf32>
    %123 = tpu.matmul %63, %122, %cst_55 {dimension_numbers = #tpu.dot_dimension_numbers<[1], [0], [0], [1], [0, 0, 1, 1], [], []>} : vector<8x8xf32>, vector<8x8xf32>, vector<8x8xf32> -> vector<8x8xf32>
    %124 = math.log %123 : vector<8x8xf32>
    %125 = vector.broadcast %119 : vector<1x8xf32> to vector<8x8xf32>
    %126 = arith.addf %124, %125 : vector<8x8xf32>
    %127 = vector.broadcast %64 : vector<1x1xf32> to vector<8x8xf32>
    %128 = arith.addf %126, %127 : vector<8x8xf32>
    %cst_56 = arith.constant 0.000000e+00 : f32
    %129 = vector.broadcast %cst_56 : f32 to vector<1x8xf32>
    %130 = arith.cmpf ogt, %117, %129 : vector<1x8xf32>
    %131 = arith.addf %128, %114 : vector<8x8xf32>
    %132 = vector.shape_cast %130 : vector<1x8xi1> to vector<1x8xi1>
    %133 = vector.broadcast %132 : vector<1x8xi1> to vector<8x8xi1>
    %134 = arith.select %133, %131, %111 : vector<8x8xi1>, vector<8x8xf32>
    %c3_i32 = arith.constant 3 : i32
    %135 = arith.index_cast %c3_i32 : i32 to index
    %c0_57 = arith.constant 0 : index
    %c0_58 = arith.constant 0 : index
    %136 = vector.load %arg2[%135, %c0_57, %c0_58] : memref<8x8x8xf32, #tpu.memory_space<vmem>>, vector<1x8x8xf32>
    %137 = vector.shape_cast %136 : vector<1x8x8xf32> to vector<8x8xf32>
    %138 = arith.index_cast %c3_i32 : i32 to index
    %c0_59 = arith.constant 0 : index
    %c0_60 = arith.constant 0 : index
    %139 = vector.load %arg4[%138, %c0_59, %c0_60] : memref<8x1x8xf32, #tpu.memory_space<vmem>>, vector<1x1x8xf32>
    %140 = vector.shape_cast %139 : vector<1x1x8xf32> to vector<1x8xf32>
    %cst_61 = arith.constant dense<0xFF800000> : vector<8xf32>
    %141 = vector.multi_reduction <maximumf>, %134, %cst_61 [0] : vector<8x8xf32> to vector<8xf32>
    %142 = vector.shape_cast %141 : vector<8xf32> to vector<1x8xf32>
    %143 = vector.broadcast %142 : vector<1x8xf32> to vector<8x8xf32>
    %144 = arith.subf %134, %143 : vector<8x8xf32>
    %145 = math.exp %144 : vector<8x8xf32>
    %cst_62 = arith.constant dense<0.000000e+00> : vector<8x8xf32>
    %146 = tpu.matmul %63, %145, %cst_62 {dimension_numbers = #tpu.dot_dimension_numbers<[1], [0], [0], [1], [0, 0, 1, 1], [], []>} : vector<8x8xf32>, vector<8x8xf32>, vector<8x8xf32> -> vector<8x8xf32>
    %147 = math.log %146 : vector<8x8xf32>
    %148 = vector.broadcast %142 : vector<1x8xf32> to vector<8x8xf32>
    %149 = arith.addf %147, %148 : vector<8x8xf32>
    %150 = vector.broadcast %64 : vector<1x1xf32> to vector<8x8xf32>
    %151 = arith.addf %149, %150 : vector<8x8xf32>
    %cst_63 = arith.constant 0.000000e+00 : f32
    %152 = vector.broadcast %cst_63 : f32 to vector<1x8xf32>
    %153 = arith.cmpf ogt, %140, %152 : vector<1x8xf32>
    %154 = arith.addf %151, %137 : vector<8x8xf32>
    %155 = vector.shape_cast %153 : vector<1x8xi1> to vector<1x8xi1>
    %156 = vector.broadcast %155 : vector<1x8xi1> to vector<8x8xi1>
    %157 = arith.select %156, %154, %134 : vector<8x8xi1>, vector<8x8xf32>
    %c4_i32 = arith.constant 4 : i32
    %158 = arith.index_cast %c4_i32 : i32 to index
    %c0_64 = arith.constant 0 : index
    %c0_65 = arith.constant 0 : index
    %159 = vector.load %arg2[%158, %c0_64, %c0_65] : memref<8x8x8xf32, #tpu.memory_space<vmem>>, vector<1x8x8xf32>
    %160 = vector.shape_cast %159 : vector<1x8x8xf32> to vector<8x8xf32>
    %161 = arith.index_cast %c4_i32 : i32 to index
    %c0_66 = arith.constant 0 : index
    %c0_67 = arith.constant 0 : index
    %162 = vector.load %arg4[%161, %c0_66, %c0_67] : memref<8x1x8xf32, #tpu.memory_space<vmem>>, vector<1x1x8xf32>
    %163 = vector.shape_cast %162 : vector<1x1x8xf32> to vector<1x8xf32>
    %cst_68 = arith.constant dense<0xFF800000> : vector<8xf32>
    %164 = vector.multi_reduction <maximumf>, %157, %cst_68 [0] : vector<8x8xf32> to vector<8xf32>
    %165 = vector.shape_cast %164 : vector<8xf32> to vector<1x8xf32>
    %166 = vector.broadcast %165 : vector<1x8xf32> to vector<8x8xf32>
    %167 = arith.subf %157, %166 : vector<8x8xf32>
    %168 = math.exp %167 : vector<8x8xf32>
    %cst_69 = arith.constant dense<0.000000e+00> : vector<8x8xf32>
    %169 = tpu.matmul %63, %168, %cst_69 {dimension_numbers = #tpu.dot_dimension_numbers<[1], [0], [0], [1], [0, 0, 1, 1], [], []>} : vector<8x8xf32>, vector<8x8xf32>, vector<8x8xf32> -> vector<8x8xf32>
    %170 = math.log %169 : vector<8x8xf32>
    %171 = vector.broadcast %165 : vector<1x8xf32> to vector<8x8xf32>
    %172 = arith.addf %170, %171 : vector<8x8xf32>
    %173 = vector.broadcast %64 : vector<1x1xf32> to vector<8x8xf32>
    %174 = arith.addf %172, %173 : vector<8x8xf32>
    %cst_70 = arith.constant 0.000000e+00 : f32
    %175 = vector.broadcast %cst_70 : f32 to vector<1x8xf32>
    %176 = arith.cmpf ogt, %163, %175 : vector<1x8xf32>
    %177 = arith.addf %174, %160 : vector<8x8xf32>
    %178 = vector.shape_cast %176 : vector<1x8xi1> to vector<1x8xi1>
    %179 = vector.broadcast %178 : vector<1x8xi1> to vector<8x8xi1>
    %180 = arith.select %179, %177, %157 : vector<8x8xi1>, vector<8x8xf32>
    %c5_i32 = arith.constant 5 : i32
    %181 = arith.index_cast %c5_i32 : i32 to index
    %c0_71 = arith.constant 0 : index
    %c0_72 = arith.constant 0 : index
    %182 = vector.load %arg2[%181, %c0_71, %c0_72] : memref<8x8x8xf32, #tpu.memory_space<vmem>>, vector<1x8x8xf32>
    %183 = vector.shape_cast %182 : vector<1x8x8xf32> to vector<8x8xf32>
    %184 = arith.index_cast %c5_i32 : i32 to index
    %c0_73 = arith.constant 0 : index
    %c0_74 = arith.constant 0 : index
    %185 = vector.load %arg4[%184, %c0_73, %c0_74] : memref<8x1x8xf32, #tpu.memory_space<vmem>>, vector<1x1x8xf32>
    %186 = vector.shape_cast %185 : vector<1x1x8xf32> to vector<1x8xf32>
    %cst_75 = arith.constant dense<0xFF800000> : vector<8xf32>
    %187 = vector.multi_reduction <maximumf>, %180, %cst_75 [0] : vector<8x8xf32> to vector<8xf32>
    %188 = vector.shape_cast %187 : vector<8xf32> to vector<1x8xf32>
    %189 = vector.broadcast %188 : vector<1x8xf32> to vector<8x8xf32>
    %190 = arith.subf %180, %189 : vector<8x8xf32>
    %191 = math.exp %190 : vector<8x8xf32>
    %cst_76 = arith.constant dense<0.000000e+00> : vector<8x8xf32>
    %192 = tpu.matmul %63, %191, %cst_76 {dimension_numbers = #tpu.dot_dimension_numbers<[1], [0], [0], [1], [0, 0, 1, 1], [], []>} : vector<8x8xf32>, vector<8x8xf32>, vector<8x8xf32> -> vector<8x8xf32>
    %193 = math.log %192 : vector<8x8xf32>
    %194 = vector.broadcast %188 : vector<1x8xf32> to vector<8x8xf32>
    %195 = arith.addf %193, %194 : vector<8x8xf32>
    %196 = vector.broadcast %64 : vector<1x1xf32> to vector<8x8xf32>
    %197 = arith.addf %195, %196 : vector<8x8xf32>
    %cst_77 = arith.constant 0.000000e+00 : f32
    %198 = vector.broadcast %cst_77 : f32 to vector<1x8xf32>
    %199 = arith.cmpf ogt, %186, %198 : vector<1x8xf32>
    %200 = arith.addf %197, %183 : vector<8x8xf32>
    %201 = vector.shape_cast %199 : vector<1x8xi1> to vector<1x8xi1>
    %202 = vector.broadcast %201 : vector<1x8xi1> to vector<8x8xi1>
    %203 = arith.select %202, %200, %180 : vector<8x8xi1>, vector<8x8xf32>
    %c6_i32 = arith.constant 6 : i32
    %204 = arith.index_cast %c6_i32 : i32 to index
    %c0_78 = arith.constant 0 : index
    %c0_79 = arith.constant 0 : index
    %205 = vector.load %arg2[%204, %c0_78, %c0_79] : memref<8x8x8xf32, #tpu.memory_space<vmem>>, vector<1x8x8xf32>
    %206 = vector.shape_cast %205 : vector<1x8x8xf32> to vector<8x8xf32>
    %207 = arith.index_cast %c6_i32 : i32 to index
    %c0_80 = arith.constant 0 : index
    %c0_81 = arith.constant 0 : index
    %208 = vector.load %arg4[%207, %c0_80, %c0_81] : memref<8x1x8xf32, #tpu.memory_space<vmem>>, vector<1x1x8xf32>
    %209 = vector.shape_cast %208 : vector<1x1x8xf32> to vector<1x8xf32>
    %cst_82 = arith.constant dense<0xFF800000> : vector<8xf32>
    %210 = vector.multi_reduction <maximumf>, %203, %cst_82 [0] : vector<8x8xf32> to vector<8xf32>
    %211 = vector.shape_cast %210 : vector<8xf32> to vector<1x8xf32>
    %212 = vector.broadcast %211 : vector<1x8xf32> to vector<8x8xf32>
    %213 = arith.subf %203, %212 : vector<8x8xf32>
    %214 = math.exp %213 : vector<8x8xf32>
    %cst_83 = arith.constant dense<0.000000e+00> : vector<8x8xf32>
    %215 = tpu.matmul %63, %214, %cst_83 {dimension_numbers = #tpu.dot_dimension_numbers<[1], [0], [0], [1], [0, 0, 1, 1], [], []>} : vector<8x8xf32>, vector<8x8xf32>, vector<8x8xf32> -> vector<8x8xf32>
    %216 = math.log %215 : vector<8x8xf32>
    %217 = vector.broadcast %211 : vector<1x8xf32> to vector<8x8xf32>
    %218 = arith.addf %216, %217 : vector<8x8xf32>
    %219 = vector.broadcast %64 : vector<1x1xf32> to vector<8x8xf32>
    %220 = arith.addf %218, %219 : vector<8x8xf32>
    %cst_84 = arith.constant 0.000000e+00 : f32
    %221 = vector.broadcast %cst_84 : f32 to vector<1x8xf32>
    %222 = arith.cmpf ogt, %209, %221 : vector<1x8xf32>
    %223 = arith.addf %220, %206 : vector<8x8xf32>
    %224 = vector.shape_cast %222 : vector<1x8xi1> to vector<1x8xi1>
    %225 = vector.broadcast %224 : vector<1x8xi1> to vector<8x8xi1>
    %226 = arith.select %225, %223, %203 : vector<8x8xi1>, vector<8x8xf32>
    %c7_i32 = arith.constant 7 : i32
    %227 = arith.index_cast %c7_i32 : i32 to index
    %c0_85 = arith.constant 0 : index
    %c0_86 = arith.constant 0 : index
    %228 = vector.load %arg2[%227, %c0_85, %c0_86] : memref<8x8x8xf32, #tpu.memory_space<vmem>>, vector<1x8x8xf32>
    %229 = vector.shape_cast %228 : vector<1x8x8xf32> to vector<8x8xf32>
    %230 = arith.index_cast %c7_i32 : i32 to index
    %c0_87 = arith.constant 0 : index
    %c0_88 = arith.constant 0 : index
    %231 = vector.load %arg4[%230, %c0_87, %c0_88] : memref<8x1x8xf32, #tpu.memory_space<vmem>>, vector<1x1x8xf32>
    %232 = vector.shape_cast %231 : vector<1x1x8xf32> to vector<1x8xf32>
    %cst_89 = arith.constant dense<0xFF800000> : vector<8xf32>
    %233 = vector.multi_reduction <maximumf>, %226, %cst_89 [0] : vector<8x8xf32> to vector<8xf32>
    %234 = vector.shape_cast %233 : vector<8xf32> to vector<1x8xf32>
    %235 = vector.broadcast %234 : vector<1x8xf32> to vector<8x8xf32>
    %236 = arith.subf %226, %235 : vector<8x8xf32>
    %237 = math.exp %236 : vector<8x8xf32>
    %cst_90 = arith.constant dense<0.000000e+00> : vector<8x8xf32>
    %238 = tpu.matmul %63, %237, %cst_90 {dimension_numbers = #tpu.dot_dimension_numbers<[1], [0], [0], [1], [0, 0, 1, 1], [], []>} : vector<8x8xf32>, vector<8x8xf32>, vector<8x8xf32> -> vector<8x8xf32>
    %239 = math.log %238 : vector<8x8xf32>
    %240 = vector.broadcast %234 : vector<1x8xf32> to vector<8x8xf32>
    %241 = arith.addf %239, %240 : vector<8x8xf32>
    %242 = vector.broadcast %64 : vector<1x1xf32> to vector<8x8xf32>
    %243 = arith.addf %241, %242 : vector<8x8xf32>
    %cst_91 = arith.constant 0.000000e+00 : f32
    %244 = vector.broadcast %cst_91 : f32 to vector<1x8xf32>
    %245 = arith.cmpf ogt, %232, %244 : vector<1x8xf32>
    %246 = arith.addf %243, %229 : vector<8x8xf32>
    %247 = vector.shape_cast %245 : vector<1x8xi1> to vector<1x8xi1>
    %248 = vector.broadcast %247 : vector<1x8xi1> to vector<8x8xi1>
    %249 = arith.select %248, %246, %226 : vector<8x8xi1>, vector<8x8xf32>
    %c8_i32_92 = arith.constant 8 : i32
    %c0_93 = arith.constant 0 : index
    %c0_94 = arith.constant 0 : index
    %250 = vector.load %arg11[%c0_93, %c0_94] : memref<8x8xf32, #tpu.memory_space<vmem>>, vector<8x8xf32>
    tpu.vector_store %arg11[%c0_93, %c0_94], %249 {strides = array<i32>} : memref<8x8xf32, #tpu.memory_space<vmem>>, vector<8x8xf32>,
    %c0_i32_95 = arith.constant 0 : i32
    %251 = arith.cmpi eq, %arg1, %c0_i32_95 : i32
    %252 = arith.extui %251 : i1 to i32
    %c0_i32_96 = arith.constant 0 : i32
    %253 = arith.cmpi ne, %252, %c0_i32_96 : i32
    scf.if %253 {
      %c0_97 = arith.constant 0 : index
      %c0_98 = arith.constant 0 : index
      %254 = vector.load %arg9[%c0_97, %c0_98] : memref<8x1xf32, #tpu.memory_space<vmem>>, vector<8x1xf32>
      %255 = vector.broadcast %254 : vector<8x1xf32> to vector<8x8xf32>
      %256 = arith.addf %249, %255 : vector<8x8xf32>
      %cst_99 = arith.constant dense<0xFF800000> : vector<8xf32>
      %257 = vector.multi_reduction <maximumf>, %256, %cst_99 [0] : vector<8x8xf32> to vector<8xf32>
      %258 = vector.shape_cast %257 : vector<8xf32> to vector<1x8xf32>
      %259 = vector.broadcast %258 : vector<1x8xf32> to vector<8x8xf32>
      %260 = arith.subf %256, %259 : vector<8x8xf32>
      %261 = math.exp %260 : vector<8x8xf32>
      %cst_100 = arith.constant dense<0.000000e+00> : vector<8xf32>
      %262 = vector.multi_reduction <add>, %261, %cst_100 [0] : vector<8x8xf32> to vector<8xf32>
      %263 = vector.shape_cast %262 : vector<8xf32> to vector<1x8xf32>
      %264 = math.log %263 : vector<1x8xf32>
      %265 = arith.addf %264, %258 : vector<1x8xf32>
      %c0_101 = arith.constant 0 : index
      %c0_102 = arith.constant 0 : index
      %266 = vector.load %arg12[%c0_101, %c0_102] : memref<1x8xf32, #tpu.memory_space<vmem>>, vector<1x8xf32>
      %267 = arith.subf %265, %266 : vector<1x8xf32>
      %268 = vector.shape_cast %267 : vector<1x8xf32> to vector<1x1x8xf32>
      %c0_103 = arith.constant 0 : index
      %c0_104 = arith.constant 0 : index
      %c0_105 = arith.constant 0 : index
      %269 = vector.load %arg10[%c0_103, %c0_104, %c0_105] : memref<1x1x8xf32, #tpu.memory_space<vmem>>, vector<1x1x8xf32>
      tpu.vector_store %arg10[%c0_103, %c0_104, %c0_105], %268 {strides = array<i32>} : memref<1x1x8xf32, #tpu.memory_space<vmem>>, vector<1x1x8xf32>,
    } else {
    }
    return
  }
  func.func @transform_0(%arg0: i32, %arg1: i32) -> (i32, i32, i32) {
    %c0_i32 = arith.constant 0 : i32
    %c0_i32_0 = arith.constant 0 : i32
    return %arg1, %c0_i32, %arg0 : i32, i32, i32
  }
  func.func @transform_1(%arg0: i32, %arg1: i32) -> (i32, i32, i32) {
    %c0_i32 = arith.constant 0 : i32
    %c0_i32_0 = arith.constant 0 : i32
    return %arg1, %c0_i32, %arg0 : i32, i32, i32
  }
  func.func @transform_2(%arg0: i32, %arg1: i32) -> (i32, i32, i32) {
    %c0_i32 = arith.constant 0 : i32
    %c0_i32_0 = arith.constant 0 : i32
    return %arg1, %c0_i32, %arg0 : i32, i32, i32
  }
  func.func @transform_3(%arg0: i32, %arg1: i32) -> (i32, i32) {
    %c0_i32 = arith.constant 0 : i32
    %c0_i32_0 = arith.constant 0 : i32
    %c0_i32_1 = arith.constant 0 : i32
    return %c0_i32, %c0_i32_0 : i32, i32
  }
  func.func @transform_4(%arg0: i32, %arg1: i32) -> (i32, i32) {
    %c0_i32 = arith.constant 0 : i32
    %c0_i32_0 = arith.constant 0 : i32
    %c0_i32_1 = arith.constant 0 : i32
    return %c0_i32, %c0_i32_0 : i32, i32
  }
  func.func @transform_5(%arg0: i32, %arg1: i32) -> (i32, i32) {
    %c0_i32 = arith.constant 0 : i32
    %c0_i32_0 = arith.constant 0 : i32
    %c0_i32_1 = arith.constant 0 : i32
    return %c0_i32, %c0_i32_0 : i32, i32
  }
  func.func @transform_6(%arg0: i32, %arg1: i32) -> (i32, i32) {
    %c0_i32 = arith.constant 0 : i32
    %c0_i32_0 = arith.constant 0 : i32
    %c0_i32_1 = arith.constant 0 : i32
    return %c0_i32, %c0_i32_0 : i32, i32
  }
  func.func @transform_7(%arg0: i32, %arg1: i32) -> (i32, i32) {
    %c0_i32 = arith.constant 0 : i32
    %c0_i32_0 = arith.constant 0 : i32
    %c0_i32_1 = arith.constant 0 : i32
    return %c0_i32, %c0_i32_0 : i32, i32
  }
  func.func @transform_8(%arg0: i32, %arg1: i32) -> (i32, i32, i32) {
    %c0_i32 = arith.constant 0 : i32
    %c0_i32_0 = arith.constant 0 : i32
    %c0_i32_1 = arith.constant 0 : i32
    return %arg0, %c0_i32, %c0_i32_0 : i32, i32, i32
  }
}

</mosaic_0001>

<llo_original>
// kernel: tpu_custom_call.1
$region0: #{tpu_custom_call.1}
  #allocation0 [shape = 'u32[]', space=smem, size = 0x4, offset = 0x4, fixed_abs, tag = 'smem constant byte address 0x4 - core index']
  #allocation1 [shape = 'u32[72,128]{1,0:T(1,128)}', space=vmem, size = 0x9000, scoped, tag = 'internal scratch']
  #allocation2 [shape = 'f32[8,8]{1,0:T(8,128)}', space=vmem, size = 0x1000, scoped, tag = 'scratch operand']
  #allocation3 [shape = 'f32[1,8]{1,0:T(1,128)}', space=vmem, size = 0x200, scoped, tag = 'scratch operand']
  #allocation4 [shape = 's32[1,8]{1,0:T(1,128)}', space=vmem, size = 0x200, scoped, tag = 'scratch operand']
  #allocation5 [shape = 'f32[1,1]{1,0:T(1,128)S(1)}', space=vmem, size = 0x200, scoped, tag = 'scoped memory for tpu_custom_call.1']
  %s0 = inlined_call_operand.vmem [shape: f32[8,8,8], index: 0, kind: input, shape index: {}]
  %s1 = inlined_call_operand.vmem [shape: s32[8,1,8], index: 1, kind: input, shape index: {}]
  %s2 = inlined_call_operand.vmem [shape: f32[8,1,8], index: 2, kind: input, shape index: {}]
  %s3 = inlined_call_operand.vmem [shape: f32[64,1], index: 3, kind: input, shape index: {}]
  %s4 = inlined_call_operand.vmem [shape: f32[8,8], index: 4, kind: input, shape index: {}]
  %s5 = inlined_call_operand.<no memory space> [shape: f32[1,1], index: 5, kind: input, shape index: {}]
  %s6 = inlined_call_operand.vmem [shape: f32[8,1], index: 6, kind: input, shape index: {}]
  %s7 = inlined_call_operand.vmem [shape: f32[8,1], index: 7, kind: input, shape index: {}]
  %s8 = inlined_call_operand.hbm [shape: f32[1,1,8], index: 8, kind: output, shape index: {}]
  %s9 = sld [smem:[#allocation0]]
  $region50: #{tpu_custom_call.1} parent=0
    _
  %s11 = ssub.s32 1, %s9
  %s12 = scalar_select 0, %s11, %s9
  %v13 = vstv %s5
  %14 = vst [vmem:[#allocation5] sm:$0x1] %v13
  $region1: #{tpu_custom_call.1} parent=0
    #allocation6 [shape = 'u8[512]{0}', space=vmem, size = 0x400, scoped, tag = 'output window, operand 0, single buffered']
    #allocation7 [shape = 's32[1]{0}', space=sflag, size = 0x4, scoped, tag = 'scoped memory for tpu_custom_call.1']
    %15 = vsyncpa [#allocation7], 0
    // Predicated region
    $region2: #{tpu_custom_call.1} parent=1 // pred_check
      _
    $region3: #{tpu_custom_call.1} parent=1 // pred_check_branch
      %17 = sbr.rel (0) target = $region5
    $region4: #{tpu_custom_call.1} parent=1 // pred_region
      _
    $region5: #{tpu_custom_call.1} parent=1 // pred_fallthru
      _
    // Predicated region
    $region6: #{tpu_custom_call.1} parent=1 // pred_check
      _
    $region7: #{tpu_custom_call.1} parent=1 // pred_check_branch
      %19 = sbr.rel (0) target = $region9
    $region8: #{tpu_custom_call.1} parent=1 // pred_region
      _
    $region9: #{tpu_custom_call.1} parent=1 // pred_fallthru
      _
    // Predicated region
    $region10: #{tpu_custom_call.1} parent=1 // pred_check
      _
    $region11: #{tpu_custom_call.1} parent=1 // pred_check_branch
      %21 = sbr.rel (0) target = $region13
    $region12: #{tpu_custom_call.1} parent=1 // pred_region
      _
    $region13: #{tpu_custom_call.1} parent=1 // pred_fallthru
      _
    // Predicated region
    $region14: #{tpu_custom_call.1} parent=1 // pred_check
      _
    $region15: #{tpu_custom_call.1} parent=1 // pred_check_branch
      %23 = sbr.rel (0) target = $region17
    $region16: #{tpu_custom_call.1} parent=1 // pred_region
      _
    $region17: #{tpu_custom_call.1} parent=1 // pred_fallthru
      _
    // Predicated region
    $region18: #{tpu_custom_call.1} parent=1 // pred_check
      _
    $region19: #{tpu_custom_call.1} parent=1 // pred_check_branch
      %25 = sbr.rel (0) target = $region21
    $region20: #{tpu_custom_call.1} parent=1 // pred_region
      _
    $region21: #{tpu_custom_call.1} parent=1 // pred_fallthru
      _
    // Predicated region
    $region22: #{tpu_custom_call.1} parent=1 // pred_check
      _
    $region23: #{tpu_custom_call.1} parent=1 // pred_check_branch
      %27 = sbr.rel (0) target = $region25
    $region24: #{tpu_custom_call.1} parent=1 // pred_region
      _
    $region25: #{tpu_custom_call.1} parent=1 // pred_fallthru
      _
    // Predicated region
    $region26: #{tpu_custom_call.1} parent=1 // pred_check
      _
    $region27: #{tpu_custom_call.1} parent=1 // pred_check_branch
      %29 = sbr.rel (0) target = $region29
    $region28: #{tpu_custom_call.1} parent=1 // pred_region
      _
    $region29: #{tpu_custom_call.1} parent=1 // pred_fallthru
      _
    // Predicated region
    $region30: #{tpu_custom_call.1} parent=1 // pred_check
      _
    $region31: #{tpu_custom_call.1} parent=1 // pred_check_branch
      %31 = sbr.rel (0) target = $region33
    $region32: #{tpu_custom_call.1} parent=1 // pred_region
      _
    $region33: #{tpu_custom_call.1} parent=1 // pred_fallthru
      _
    %v32 = vld [vmem:[%s6] sm:$0xff]
    %v33 = vld [vmem:[%s1] sm:$0x1]
    %v34 = vld [vmem:[%s1 + $0x1] sm:$0x1]
    %v35 = vld [vmem:[%s1 + $0x2] sm:$0x1]
    %v36 = vld [vmem:[%s1 + $0x3] sm:$0x1]
    %v37 = vld [vmem:[%s1 + $0x4] sm:$0x1]
    %v38 = vld [vmem:[%s1 + $0x5] sm:$0x1]
    %v39 = vld [vmem:[%s1 + $0x6] sm:$0x1]
    %v40 = vld [vmem:[%s1 + $0x7] sm:$0x1]
    %v41 = vld [vmem:[%s2] sm:$0x1]
    %v42 = vld [vmem:[%s2 + $0x1] sm:$0x1]
    %v43 = vld [vmem:[%s2 + $0x2] sm:$0x1]
    %v44 = vld [vmem:[%s2 + $0x3] sm:$0x1]
    %v45 = vld [vmem:[%s2 + $0x4] sm:$0x1]
    %v46 = vld [vmem:[%s2 + $0x5] sm:$0x1]
    %v47 = vld [vmem:[%s2 + $0x6] sm:$0x1]
    %v48 = vld [vmem:[%s2 + $0x7] sm:$0x1]
    %v49 = vld [vmem:[%s0] sm:$0xff]
    %v50 = vld [vmem:[%s0 + $0x8] sm:$0xff]
    %v51 = vld [vmem:[%s0 + $0x10] sm:$0xff]
    %v52 = vld [vmem:[%s0 + $0x18] sm:$0xff]
    %v53 = vld [vmem:[%s0 + $0x20] sm:$0xff]
    %v54 = vld [vmem:[%s0 + $0x28] sm:$0xff]
    %v55 = vld [vmem:[%s0 + $0x30] sm:$0xff]
    %v56 = vld [vmem:[%s0 + $0x38] sm:$0xff]
    %v57 = vlaneseq
    %v58 = vshrl.u32 %v57, 7
    %p59 = scmp.eq.s32.totalorder 0, 0
    // Predicated region
    $region34: #{tpu_custom_call.1} parent=1 // pred_check
      %p60 = pneg %p59
    $region35: #{tpu_custom_call.1} parent=1 // pred_check_branch
      %62 = sbr.rel (%p60) target = $region37
    $region36: #{tpu_custom_call.1} parent=1 // pred_region
      %v63 = vld [vmem:[%s0] sm:$0xff]
      %65 = vset.pattern.permute.xlu0 0
      %66 = vperm.xlu0 %65, %v32
      %v67 = vpop.permute.xlu0 %66
      %v69 = vadd.f32 %v67, %v63
      %vm70 = vcmask 64512
      %71 = vst.msk [vmem:[#allocation2] sm:$0xff] %vm70, %v69
      %v72 = vperm.slane %v33, 0
      %vm73 = vcmp.eq.s32.totalorder %v58, %v72
      %v74 = vsel %vm73, %v69, 0.0
      %v75 = vsel %vm70, %v74, 0.0
      %v76 = vrot.slane %v75, 4
      %v77 = vadd.f32 %v75, %v76
      %v78 = vrot.slane %v77, 2
      %v79 = vadd.f32 %v77, %v78
      %v80 = vrot.slane %v79, 1
      %v81 = vadd.f32 %v79, %v80
      %vm82 = vcmask 57344
      %83 = vst.msk [vmem:[#allocation3] sm:$0x1] %vm82, %v81
      %84 = vst.msk [vmem:[#allocation4] sm:$0x1] %vm82, 0
    $region37: #{tpu_custom_call.1} parent=1 // pred_fallthru
      _
    %v85 = vperm.slane %v33, 0
    %v86 = vperm.slane %v34, 0
    %v87 = vperm.slane %v35, 0
    %v88 = vperm.slane %v36, 0
    %v89 = vperm.slane %v37, 0
    %v90 = vperm.slane %v38, 0
    %v91 = vperm.slane %v39, 0
    %v92 = vperm.slane %v40, 0
    %vm93 = vcmp.eq.s32.totalorder %v58, %v85
    %vm94 = vcmp.eq.s32.totalorder %v58, %v86
    %vm95 = vcmp.eq.s32.totalorder %v58, %v87
    %vm96 = vcmp.eq.s32.totalorder %v58, %v88
    %vm97 = vcmp.eq.s32.totalorder %v58, %v89
    %vm98 = vcmp.eq.s32.totalorder %v58, %v90
    %vm99 = vcmp.eq.s32.totalorder %v58, %v91
    %vm100 = vcmp.eq.s32.totalorder %v58, %v92
    %v101 = vsel %vm93, %v49, 0.0
    %v102 = vsel %vm94, %v50, 0.0
    %v103 = vsel %vm95, %v51, 0.0
    %v104 = vsel %vm96, %v52, 0.0
    %v105 = vsel %vm97, %v53, 0.0
    %v106 = vsel %vm98, %v54, 0.0
    %v107 = vsel %vm99, %v55, 0.0
    %v108 = vsel %vm100, %v56, 0.0
    %vm109 = vcmask 64512
    %v110 = vsel %vm109, %v101, 0.0
    %v111 = vrot.slane %v110, 4
    %v112 = vadd.f32 %v110, %v111
    %v113 = vrot.slane %v112, 2
    %v114 = vadd.f32 %v112, %v113
    %v115 = vrot.slane %v114, 1
    %v116 = vadd.f32 %v114, %v115
    %v117 = vsel %vm109, %v102, 0.0
    %v118 = vrot.slane %v117, 4
    %v119 = vadd.f32 %v117, %v118
    %v120 = vrot.slane %v119, 2
    %v121 = vadd.f32 %v119, %v120
    %v122 = vrot.slane %v121, 1
    %v123 = vadd.f32 %v121, %v122
    %v124 = vsel %vm109, %v103, 0.0
    %v125 = vrot.slane %v124, 4
    %v126 = vadd.f32 %v124, %v125
    %v127 = vrot.slane %v126, 2
    %v128 = vadd.f32 %v126, %v127
    %v129 = vrot.slane %v128, 1
    %v130 = vadd.f32 %v128, %v129
    %v131 = vsel %vm109, %v104, 0.0
    %v132 = vrot.slane %v131, 4
    %v133 = vadd.f32 %v131, %v132
    %v134 = vrot.slane %v133, 2
    %v135 = vadd.f32 %v133, %v134
    %v136 = vrot.slane %v135, 1
    %v137 = vadd.f32 %v135, %v136
    %v138 = vsel %vm109, %v105, 0.0
    %v139 = vrot.slane %v138, 4
    %v140 = vadd.f32 %v138, %v139
    %v141 = vrot.slane %v140, 2
    %v142 = vadd.f32 %v140, %v141
    %v143 = vrot.slane %v142, 1
    %v144 = vadd.f32 %v142, %v143
    %v145 = vsel %vm109, %v106, 0.0
    %v146 = vrot.slane %v145, 4
    %v147 = vadd.f32 %v145, %v146
    %v148 = vrot.slane %v147, 2
    %v149 = vadd.f32 %v147, %v148
    %v150 = vrot.slane %v149, 1
    %v151 = vadd.f32 %v149, %v150
    %v152 = vsel %vm109, %v107, 0.0
    %v153 = vrot.slane %v152, 4
    %v154 = vadd.f32 %v152, %v153
    %v155 = vrot.slane %v154, 2
    %v156 = vadd.f32 %v154, %v155
    %v157 = vrot.slane %v156, 1
    %v158 = vadd.f32 %v156, %v157
    %v159 = vsel %vm109, %v108, 0.0
    %v160 = vrot.slane %v159, 4
    %v161 = vadd.f32 %v159, %v160
    %v162 = vrot.slane %v161, 2
    %v163 = vadd.f32 %v161, %v162
    %v164 = vrot.slane %v163, 1
    %v165 = vadd.f32 %v163, %v164
    %v166 = vmul.f32 %v116, %v41
    %v167 = vmul.f32 %v123, %v42
    %v168 = vmul.f32 %v130, %v43
    %v169 = vmul.f32 %v137, %v44
    %v170 = vmul.f32 %v144, %v45
    %v171 = vmul.f32 %v151, %v46
    %v172 = vmul.f32 %v158, %v47
    %v173 = vmul.f32 %v165, %v48
    %vm174 = vcmask 57344
    %v175 = vsel %vm174, %v166, 0.0
    %v176 = vsel %vm174, %v167, 0.0
    %v177 = vadd.f32 %v175, %v176
    %v178 = vsel %vm174, %v168, 0.0
    %v179 = vadd.f32 %v177, %v178
    %v180 = vsel %vm174, %v169, 0.0
    %v181 = vadd.f32 %v179, %v180
    %v182 = vsel %vm174, %v170, 0.0
    %v183 = vadd.f32 %v181, %v182
    %v184 = vsel %vm174, %v171, 0.0
    %v185 = vadd.f32 %v183, %v184
    %v186 = vsel %vm174, %v172, 0.0
    %v187 = vadd.f32 %v185, %v186
    %v188 = vsel %vm174, %v173, 0.0
    %v189 = vadd.f32 %v187, %v188
    %v190 = vld [vmem:[%s3] sm:$0xff]
    %v191 = vld [vmem:[%s3 + $0x8] sm:$0xff]
    %v192 = vld [vmem:[%s3 + $0x10] sm:$0xff]
    %v193 = vld [vmem:[%s3 + $0x18] sm:$0xff]
    %v194 = vld [vmem:[%s3 + $0x20] sm:$0xff]
    %v195 = vld [vmem:[%s3 + $0x28] sm:$0xff]
    %v196 = vld [vmem:[%s3 + $0x30] sm:$0xff]
    %v197 = vld [vmem:[%s3 + $0x38] sm:$0xff]
    %v198 = vadd.s32 %v58, 8
    %v199 = vadd.s32 %v58, 16
    %v200 = vadd.s32 %v58, 24
    %v201 = vadd.s32 %v58, 32
    %v202 = vadd.s32 %v58, 40
    %v203 = vadd.s32 %v58, 48
    %v204 = vadd.s32 %v58, 56
    %v205 = vld [vmem:[#allocation4] sm:$0x1]
    %v206 = vmul.u32 %v205, 8
    %v207 = vadd.s32 %v206, %v33
    %v208 = vperm.slane %v207, 0
    %vm209 = vcmp.eq.s32.totalorder %v58, %v208
    %vm210 = vcmp.eq.s32.totalorder %v198, %v208
    %vm211 = vcmp.eq.s32.totalorder %v199, %v208
    %vm212 = vcmp.eq.s32.totalorder %v200, %v208
    %vm213 = vcmp.eq.s32.totalorder %v201, %v208
    %vm214 = vcmp.eq.s32.totalorder %v202, %v208
    %vm215 = vcmp.eq.s32.totalorder %v203, %v208
    %vm216 = vcmp.eq.s32.totalorder %v204, %v208
    %218 = vset.pattern.permute.xlu0 0
    %219 = vperm.xlu0 %218, %v190
    %v220 = vpop.permute.xlu0 %219
    %223 = vset.pattern.permute.xlu0 0
    %224 = vperm.xlu0 %223, %v191
    %v225 = vpop.permute.xlu0 %224
    %228 = vset.pattern.permute.xlu0 0
    %229 = vperm.xlu0 %228, %v192
    %v230 = vpop.permute.xlu0 %229
    %233 = vset.pattern.permute.xlu0 0
    %234 = vperm.xlu0 %233, %v193
    %v235 = vpop.permute.xlu0 %234
    %238 = vset.pattern.permute.xlu0 0
    %239 = vperm.xlu0 %238, %v194
    %v240 = vpop.permute.xlu0 %239
    %243 = vset.pattern.permute.xlu0 0
    %244 = vperm.xlu0 %243, %v195
    %v245 = vpop.permute.xlu0 %244
    %248 = vset.pattern.permute.xlu0 0
    %249 = vperm.xlu0 %248, %v196
    %v250 = vpop.permute.xlu0 %249
    %253 = vset.pattern.permute.xlu0 0
    %254 = vperm.xlu0 %253, %v197
    %v255 = vpop.permute.xlu0 %254
    %v257 = vsel %vm209, %v220, 0.0
    %v258 = vsel %vm210, %v225, 0.0
    %v259 = vsel %vm211, %v230, 0.0
    %v260 = vsel %vm212, %v235, 0.0
    %v261 = vsel %vm213, %v240, 0.0
    %v262 = vsel %vm214, %v245, 0.0
    %v263 = vsel %vm215, %v250, 0.0
    %v264 = vsel %vm216, %v255, 0.0
    %v265 = vsel %vm109, %v257, 0.0
    %v266 = vsel %vm109, %v258, 0.0
    %v267 = vadd.f32 %v265, %v266
    %v268 = vsel %vm109, %v259, 0.0
    %v269 = vadd.f32 %v267, %v268
    %v270 = vsel %vm109, %v260, 0.0
    %v271 = vadd.f32 %v269, %v270
    %v272 = vsel %vm109, %v261, 0.0
    %v273 = vadd.f32 %v271, %v272
    %v274 = vsel %vm109, %v262, 0.0
    %v275 = vadd.f32 %v273, %v274
    %v276 = vsel %vm109, %v263, 0.0
    %v277 = vadd.f32 %v275, %v276
    %v278 = vsel %vm109, %v264, 0.0
    %v279 = vadd.f32 %v277, %v278
    %v280 = vrot.slane %v279, 4
    %v281 = vadd.f32 %v279, %v280
    %v282 = vrot.slane %v281, 2
    %v283 = vadd.f32 %v281, %v282
    %v284 = vrot.slane %v283, 1
    %v285 = vadd.f32 %v283, %v284
    %v286 = vmul.f32 %v285, %v41
    %v287 = vadd.f32 %v189, %v286
    %v288 = vmul.u32 %v33, 8
    %v289 = vmul.u32 %v34, 8
    %v290 = vmul.u32 %v35, 8
    %v291 = vmul.u32 %v36, 8
    %v292 = vmul.u32 %v37, 8
    %v293 = vmul.u32 %v38, 8
    %v294 = vmul.u32 %v39, 8
    %v295 = vadd.s32 %v288, %v34
    %v296 = vadd.s32 %v289, %v35
    %v297 = vadd.s32 %v290, %v36
    %v298 = vadd.s32 %v291, %v37
    %v299 = vadd.s32 %v292, %v38
    %v300 = vadd.s32 %v293, %v39
    %v301 = vadd.s32 %v294, %v40
    %v302 = vperm.slane %v295, 0
    %v303 = vperm.slane %v296, 0
    %v304 = vperm.slane %v297, 0
    %v305 = vperm.slane %v298, 0
    %v306 = vperm.slane %v299, 0
    %v307 = vperm.slane %v300, 0
    %v308 = vperm.slane %v301, 0
    %vm309 = vcmp.eq.s32.totalorder %v58, %v302
    %vm310 = vcmp.eq.s32.totalorder %v198, %v302
    %vm311 = vcmp.eq.s32.totalorder %v199, %v302
    %vm312 = vcmp.eq.s32.totalorder %v200, %v302
    %vm313 = vcmp.eq.s32.totalorder %v201, %v302
    %vm314 = vcmp.eq.s32.totalorder %v202, %v302
    %vm315 = vcmp.eq.s32.totalorder %v203, %v302
    %vm316 = vcmp.eq.s32.totalorder %v204, %v302
    %vm317 = vcmp.eq.s32.totalorder %v58, %v303
    %vm318 = vcmp.eq.s32.totalorder %v198, %v303
    %vm319 = vcmp.eq.s32.totalorder %v199, %v303
    %vm320 = vcmp.eq.s32.totalorder %v200, %v303
    %vm321 = vcmp.eq.s32.totalorder %v201, %v303
    %vm322 = vcmp.eq.s32.totalorder %v202, %v303
    %vm323 = vcmp.eq.s32.totalorder %v203, %v303
    %vm324 = vcmp.eq.s32.totalorder %v204, %v303
    %vm325 = vcmp.eq.s32.totalorder %v58, %v304
    %vm326 = vcmp.eq.s32.totalorder %v198, %v304
    %vm327 = vcmp.eq.s32.totalorder %v199, %v304
    %vm328 = vcmp.eq.s32.totalorder %v200, %v304
    %vm329 = vcmp.eq.s32.totalorder %v201, %v304
    %vm330 = vcmp.eq.s32.totalorder %v202, %v304
    %vm331 = vcmp.eq.s32.totalorder %v203, %v304
    %vm332 = vcmp.eq.s32.totalorder %v204, %v304
    %vm333 = vcmp.eq.s32.totalorder %v58, %v305
    %vm334 = vcmp.eq.s32.totalorder %v198, %v305
    %vm335 = vcmp.eq.s32.totalorder %v199, %v305
    %vm336 = vcmp.eq.s32.totalorder %v200, %v305
    %vm337 = vcmp.eq.s32.totalorder %v201, %v305
    %vm338 = vcmp.eq.s32.totalorder %v202, %v305
    %vm339 = vcmp.eq.s32.totalorder %v203, %v305
    %vm340 = vcmp.eq.s32.totalorder %v204, %v305
    %vm341 = vcmp.eq.s32.totalorder %v58, %v306
    %vm342 = vcmp.eq.s32.totalorder %v198, %v306
    %vm343 = vcmp.eq.s32.totalorder %v199, %v306
    %vm344 = vcmp.eq.s32.totalorder %v200, %v306
    %vm345 = vcmp.eq.s32.totalorder %v201, %v306
    %vm346 = vcmp.eq.s32.totalorder %v202, %v306
    %vm347 = vcmp.eq.s32.totalorder %v203, %v306
    %vm348 = vcmp.eq.s32.totalorder %v204, %v306
    %vm349 = vcmp.eq.s32.totalorder %v58, %v307
    %vm350 = vcmp.eq.s32.totalorder %v198, %v307
    %vm351 = vcmp.eq.s32.totalorder %v199, %v307
    %vm352 = vcmp.eq.s32.totalorder %v200, %v307
    %vm353 = vcmp.eq.s32.totalorder %v201, %v307
    %vm354 = vcmp.eq.s32.totalorder %v202, %v307
    %vm355 = vcmp.eq.s32.totalorder %v203, %v307
    %vm356 = vcmp.eq.s32.totalorder %v204, %v307
    %vm357 = vcmp.eq.s32.totalorder %v58, %v308
    %vm358 = vcmp.eq.s32.totalorder %v198, %v308
    %vm359 = vcmp.eq.s32.totalorder %v199, %v308
    %vm360 = vcmp.eq.s32.totalorder %v200, %v308
    %vm361 = vcmp.eq.s32.totalorder %v201, %v308
    %vm362 = vcmp.eq.s32.totalorder %v202, %v308
    %vm363 = vcmp.eq.s32.totalorder %v203, %v308
    %vm364 = vcmp.eq.s32.totalorder %v204, %v308
    %v365 = vsel %vm309, %v220, 0.0
    %v366 = vsel %vm310, %v225, 0.0
    %v367 = vsel %vm311, %v230, 0.0
    %v368 = vsel %vm312, %v235, 0.0
    %v369 = vsel %vm313, %v240, 0.0
    %v370 = vsel %vm314, %v245, 0.0
    %v371 = vsel %vm315, %v250, 0.0
    %v372 = vsel %vm316, %v255, 0.0
    %v373 = vsel %vm317, %v220, 0.0
    %v374 = vsel %vm318, %v225, 0.0
    %v375 = vsel %vm319, %v230, 0.0
    %v376 = vsel %vm320, %v235, 0.0
    %v377 = vsel %vm321, %v240, 0.0
    %v378 = vsel %vm322, %v245, 0.0
    %v379 = vsel %vm323, %v250, 0.0
    %v380 = vsel %vm324, %v255, 0.0
    %v381 = vsel %vm325, %v220, 0.0
    %v382 = vsel %vm326, %v225, 0.0
    %v383 = vsel %vm327, %v230, 0.0
    %v384 = vsel %vm328, %v235, 0.0
    %v385 = vsel %vm329, %v240, 0.0
    %v386 = vsel %vm330, %v245, 0.0
    %v387 = vsel %vm331, %v250, 0.0
    %v388 = vsel %vm332, %v255, 0.0
    %v389 = vsel %vm333, %v220, 0.0
    %v390 = vsel %vm334, %v225, 0.0
    %v391 = vsel %vm335, %v230, 0.0
    %v392 = vsel %vm336, %v235, 0.0
    %v393 = vsel %vm337, %v240, 0.0
    %v394 = vsel %vm338, %v245, 0.0
    %v395 = vsel %vm339, %v250, 0.0
    %v396 = vsel %vm340, %v255, 0.0
    %v397 = vsel %vm341, %v220, 0.0
    %v398 = vsel %vm342, %v225, 0.0
    %v399 = vsel %vm343, %v230, 0.0
    %v400 = vsel %vm344, %v235, 0.0
    %v401 = vsel %vm345, %v240, 0.0
    %v402 = vsel %vm346, %v245, 0.0
    %v403 = vsel %vm347, %v250, 0.0
    %v404 = vsel %vm348, %v255, 0.0
    %v405 = vsel %vm349, %v220, 0.0
    %v406 = vsel %vm350, %v225, 0.0
    %v407 = vsel %vm351, %v230, 0.0
    %v408 = vsel %vm352, %v235, 0.0
    %v409 = vsel %vm353, %v240, 0.0
    %v410 = vsel %vm354, %v245, 0.0
    %v411 = vsel %vm355, %v250, 0.0
    %v412 = vsel %vm356, %v255, 0.0
    %v413 = vsel %vm357, %v220, 0.0
    %v414 = vsel %vm358, %v225, 0.0
    %v415 = vsel %vm359, %v230, 0.0
    %v416 = vsel %vm360, %v235, 0.0
    %v417 = vsel %vm361, %v240, 0.0
    %v418 = vsel %vm362, %v245, 0.0
    %v419 = vsel %vm363, %v250, 0.0
    %v420 = vsel %vm364, %v255, 0.0
    %v421 = vsel %vm109, %v365, 0.0
    %v422 = vsel %vm109, %v366, 0.0
    %v423 = vadd.f32 %v421, %v422
    %v424 = vsel %vm109, %v367, 0.0
    %v425 = vadd.f32 %v423, %v424
    %v426 = vsel %vm109, %v368, 0.0
    %v427 = vadd.f32 %v425, %v426
    %v428 = vsel %vm109, %v369, 0.0
    %v429 = vadd.f32 %v427, %v428
    %v430 = vsel %vm109, %v370, 0.0
    %v431 = vadd.f32 %v429, %v430
    %v432 = vsel %vm109, %v371, 0.0
    %v433 = vadd.f32 %v431, %v432
    %v434 = vsel %vm109, %v372, 0.0
    %v435 = vadd.f32 %v433, %v434
    %v436 = vrot.slane %v435, 4
    %v437 = vadd.f32 %v435, %v436
    %v438 = vrot.slane %v437, 2
    %v439 = vadd.f32 %v437, %v438
    %v440 = vrot.slane %v439, 1
    %v441 = vadd.f32 %v439, %v440
    %v442 = vsel %vm109, %v373, 0.0
    %v443 = vsel %vm109, %v374, 0.0
    %v444 = vadd.f32 %v442, %v443
    %v445 = vsel %vm109, %v375, 0.0
    %v446 = vadd.f32 %v444, %v445
    %v447 = vsel %vm109, %v376, 0.0
    %v448 = vadd.f32 %v446, %v447
    %v449 = vsel %vm109, %v377, 0.0
    %v450 = vadd.f32 %v448, %v449
    %v451 = vsel %vm109, %v378, 0.0
    %v452 = vadd.f32 %v450, %v451
    %v453 = vsel %vm109, %v379, 0.0
    %v454 = vadd.f32 %v452, %v453
    %v455 = vsel %vm109, %v380, 0.0
    %v456 = vadd.f32 %v454, %v455
    %v457 = vrot.slane %v456, 4
    %v458 = vadd.f32 %v456, %v457
    %v459 = vrot.slane %v458, 2
    %v460 = vadd.f32 %v458, %v459
    %v461 = vrot.slane %v460, 1
    %v462 = vadd.f32 %v460, %v461
    %v463 = vsel %vm109, %v381, 0.0
    %v464 = vsel %vm109, %v382, 0.0
    %v465 = vadd.f32 %v463, %v464
    %v466 = vsel %vm109, %v383, 0.0
    %v467 = vadd.f32 %v465, %v466
    %v468 = vsel %vm109, %v384, 0.0
    %v469 = vadd.f32 %v467, %v468
    %v470 = vsel %vm109, %v385, 0.0
    %v471 = vadd.f32 %v469, %v470
    %v472 = vsel %vm109, %v386, 0.0
    %v473 = vadd.f32 %v471, %v472
    %v474 = vsel %vm109, %v387, 0.0
    %v475 = vadd.f32 %v473, %v474
    %v476 = vsel %vm109, %v388, 0.0
    %v477 = vadd.f32 %v475, %v476
    %v478 = vrot.slane %v477, 4
    %v479 = vadd.f32 %v477, %v478
    %v480 = vrot.slane %v479, 2
    %v481 = vadd.f32 %v479, %v480
    %v482 = vrot.slane %v481, 1
    %v483 = vadd.f32 %v481, %v482
    %v484 = vsel %vm109, %v389, 0.0
    %v485 = vsel %vm109, %v390, 0.0
    %v486 = vadd.f32 %v484, %v485
    %v487 = vsel %vm109, %v391, 0.0
    %v488 = vadd.f32 %v486, %v487
    %v489 = vsel %vm109, %v392, 0.0
    %v490 = vadd.f32 %v488, %v489
    %v491 = vsel %vm109, %v393, 0.0
    %v492 = vadd.f32 %v490, %v491
    %v493 = vsel %vm109, %v394, 0.0
    %v494 = vadd.f32 %v492, %v493
    %v495 = vsel %vm109, %v395, 0.0
    %v496 = vadd.f32 %v494, %v495
    %v497 = vsel %vm109, %v396, 0.0
    %v498 = vadd.f32 %v496, %v497
    %v499 = vrot.slane %v498, 4
    %v500 = vadd.f32 %v498, %v499
    %v501 = vrot.slane %v500, 2
    %v502 = vadd.f32 %v500, %v501
    %v503 = vrot.slane %v502, 1
    %v504 = vadd.f32 %v502, %v503
    %v505 = vsel %vm109, %v397, 0.0
    %v506 = vsel %vm109, %v398, 0.0
    %v507 = vadd.f32 %v505, %v506
    %v508 = vsel %vm109, %v399, 0.0
    %v509 = vadd.f32 %v507, %v508
    %v510 = vsel %vm109, %v400, 0.0
    %v511 = vadd.f32 %v509, %v510
    %v512 = vsel %vm109, %v401, 0.0
    %v513 = vadd.f32 %v511, %v512
    %v514 = vsel %vm109, %v402, 0.0
    %v515 = vadd.f32 %v513, %v514
    %v516 = vsel %vm109, %v403, 0.0
    %v517 = vadd.f32 %v515, %v516
    %v518 = vsel %vm109, %v404, 0.0
    %v519 = vadd.f32 %v517, %v518
    %v520 = vrot.slane %v519, 4
    %v521 = vadd.f32 %v519, %v520
    %v522 = vrot.slane %v521, 2
    %v523 = vadd.f32 %v521, %v522
    %v524 = vrot.slane %v523, 1
    %v525 = vadd.f32 %v523, %v524
    %v526 = vsel %vm109, %v405, 0.0
    %v527 = vsel %vm109, %v406, 0.0
    %v528 = vadd.f32 %v526, %v527
    %v529 = vsel %vm109, %v407, 0.0
    %v530 = vadd.f32 %v528, %v529
    %v531 = vsel %vm109, %v408, 0.0
    %v532 = vadd.f32 %v530, %v531
    %v533 = vsel %vm109, %v409, 0.0
    %v534 = vadd.f32 %v532, %v533
    %v535 = vsel %vm109, %v410, 0.0
    %v536 = vadd.f32 %v534, %v535
    %v537 = vsel %vm109, %v411, 0.0
    %v538 = vadd.f32 %v536, %v537
    %v539 = vsel %vm109, %v412, 0.0
    %v540 = vadd.f32 %v538, %v539
    %v541 = vrot.slane %v540, 4
    %v542 = vadd.f32 %v540, %v541
    %v543 = vrot.slane %v542, 2
    %v544 = vadd.f32 %v542, %v543
    %v545 = vrot.slane %v544, 1
    %v546 = vadd.f32 %v544, %v545
    %v547 = vsel %vm109, %v413, 0.0
    %v548 = vsel %vm109, %v414, 0.0
    %v549 = vadd.f32 %v547, %v548
    %v550 = vsel %vm109, %v415, 0.0
    %v551 = vadd.f32 %v549, %v550
    %v552 = vsel %vm109, %v416, 0.0
    %v553 = vadd.f32 %v551, %v552
    %v554 = vsel %vm109, %v417, 0.0
    %v555 = vadd.f32 %v553, %v554
    %v556 = vsel %vm109, %v418, 0.0
    %v557 = vadd.f32 %v555, %v556
    %v558 = vsel %vm109, %v419, 0.0
    %v559 = vadd.f32 %v557, %v558
    %v560 = vsel %vm109, %v420, 0.0
    %v561 = vadd.f32 %v559, %v560
    %v562 = vrot.slane %v561, 4
    %v563 = vadd.f32 %v561, %v562
    %v564 = vrot.slane %v563, 2
    %v565 = vadd.f32 %v563, %v564
    %v566 = vrot.slane %v565, 1
    %v567 = vadd.f32 %v565, %v566
    %v568 = vmul.f32 %v441, %v42
    %v569 = vmul.f32 %v462, %v43
    %v570 = vmul.f32 %v483, %v44
    %v571 = vmul.f32 %v504, %v45
    %v572 = vmul.f32 %v525, %v46
    %v573 = vmul.f32 %v546, %v47
    %v574 = vmul.f32 %v567, %v48
    %v575 = vsel %vm174, %v568, 0.0
    %v576 = vsel %vm174, %v569, 0.0
    %v577 = vadd.f32 %v575, %v576
    %v578 = vsel %vm174, %v570, 0.0
    %v579 = vadd.f32 %v577, %v578
    %v580 = vsel %vm174, %v571, 0.0
    %v581 = vadd.f32 %v579, %v580
    %v582 = vsel %vm174, %v572, 0.0
    %v583 = vadd.f32 %v581, %v582
    %v584 = vsel %vm174, %v573, 0.0
    %v585 = vadd.f32 %v583, %v584
    %v586 = vsel %vm174, %v574, 0.0
    %v587 = vadd.f32 %v585, %v586
    %v588 = vadd.f32 %v287, %v587
    %v589 = vld [vmem:[#allocation3] sm:$0x1]
    %v590 = vadd.f32 %v589, %v588
    %591 = vst.msk [vmem:[#allocation3] sm:$0x1] %vm174, %v590
    %592 = vst.msk [vmem:[#allocation4] sm:$0x1] %vm174, %v40
    %v593 = vld [vmem:[%s4] sm:$0xff]
    %v594 = vld [vmem:[#allocation5] sm:$0x1]
    %v595 = vld [vmem:[#allocation2] sm:$0xff]
    %v596 = vld [vmem:[%s0] sm:$0xff]
    %v597 = vld [vmem:[%s2] sm:$0x1]
    %v598 = vsel %vm109, %v595, -inf
    %v599 = vrot.slane %v598, 4
    %v600 = vmax.f32 %v598, %v599
    %v601 = vrot.slane %v600, 2
    %v602 = vmax.f32 %v600, %v601
    %v603 = vrot.slane %v602, 1
    %v604 = vmax.f32 %v602, %v603
    %v605 = vsub.f32 %v595, %v604
    %v606 = vmul.f32 %v605, 1.442695
    %v607 = vpow.pop %v606
    %v609 = vsel %vm109, %v593, 0
    %611 = vmatpush.msra.mxu0 0.0
    %612 = vmatpush.msra.mxu0 0.0
    %613 = vmatpush.msra.mxu0 0.0
    %614 = vmatpush.msra.mxu0 0.0
    %615 = vmatpush.msra.mxu0 0.0
    %616 = vmatpush.msra.mxu0 0.0
    %617 = vmatpush.msra.mxu0 0.0
    %618 = vmatpush.msra.mxu0 0.0
    %619 = vmatpush.msra.mxu0 0.0
    %620 = vmatpush.msra.mxu0 0.0
    %621 = vmatpush.msra.mxu0 0.0
    %622 = vmatpush.msra.mxu0 0.0
    %623 = vmatpush.msra.mxu0 0.0
    %624 = vmatpush.msra.mxu0 0.0
    %625 = vmatpush.msra.mxu0 0.0
    %626 = vmatpush.msra.mxu0 %v607
    %627 = vmatmul.f32.gmra.mxu0 %v609
    %v628 = vpop.f32.mrf.mxu0
    %v629 = vadd.f32 0.0, %v628
    %630 = vdwg.mxu0
    %v631 = vlog2.pop %v629
    %v632 = vmul.f32 %v631, 0.6931472
    %v633 = vadd.f32 %v632, %v604
    %v635 = vperm.slane %v594, 0
    %636 = vset.pattern.permute.xlu0 0
    %637 = vperm.xlu0 %636, %v635
    %v638 = vpop.permute.xlu0 %637
    %v640 = vadd.f32 %v633, %v638
    %vm641 = vcmp.gt.f32.partialorder %v597, 0.0
    %v642 = vadd.f32 %v640, %v596
    %v643 = vsel %vm641, 1, 0
    %v644 = vperm.slane %v643, 0
    %vm645 = vcmp.eq.s32.totalorder %v644, 1
    %v646 = vsel %vm645, %v642, %v595
    %s647 = scalar_lea.vmem %s0, 8
    %v648 = vld [vmem:[%s647] sm:$0xff]
    %s649 = scalar_lea.vmem %s2, 1
    %v650 = vld [vmem:[%s649] sm:$0x1]
    %v651 = vsel %vm109, %v646, -inf
    %v652 = vrot.slane %v651, 4
    %v653 = vmax.f32 %v651, %v652
    %v654 = vrot.slane %v653, 2
    %v655 = vmax.f32 %v653, %v654
    %v656 = vrot.slane %v655, 1
    %v657 = vmax.f32 %v655, %v656
    %v658 = vsub.f32 %v646, %v657
    %v659 = vmul.f32 %v658, 1.442695
    %v660 = vpow.pop %v659
    %661 = vmatpush.msra.mxu0 0.0
    %662 = vmatpush.msra.mxu0 0.0
    %663 = vmatpush.msra.mxu0 0.0
    %664 = vmatpush.msra.mxu0 0.0
    %665 = vmatpush.msra.mxu0 0.0
    %666 = vmatpush.msra.mxu0 0.0
    %667 = vmatpush.msra.mxu0 0.0
    %668 = vmatpush.msra.mxu0 0.0
    %669 = vmatpush.msra.mxu0 0.0
    %670 = vmatpush.msra.mxu0 0.0
    %671 = vmatpush.msra.mxu0 0.0
    %672 = vmatpush.msra.mxu0 0.0
    %673 = vmatpush.msra.mxu0 0.0
    %674 = vmatpush.msra.mxu0 0.0
    %675 = vmatpush.msra.mxu0 0.0
    %676 = vmatpush.msra.mxu0 %v660
    %677 = vmatmul.f32.gmra.mxu0 %v609
    %v678 = vpop.f32.mrf.mxu0
    %v679 = vadd.f32 0.0, %v678
    %680 = vdwg.mxu0
    %v681 = vlog2.pop %v679
    %v682 = vmul.f32 %v681, 0.6931472
    %v683 = vadd.f32 %v682, %v657
    %v684 = vadd.f32 %v683, %v638
    %vm685 = vcmp.gt.f32.partialorder %v650, 0.0
    %v686 = vadd.f32 %v684, %v648
    %v687 = vsel %vm685, 1, 0
    %v688 = vperm.slane %v687, 0
    %vm689 = vcmp.eq.s32.totalorder %v688, 1
    %v690 = vsel %vm689, %v686, %v646
    %s691 = scalar_lea.vmem %s0, 16
    %v692 = vld [vmem:[%s691] sm:$0xff]
    %s693 = scalar_lea.vmem %s2, 2
    %v694 = vld [vmem:[%s693] sm:$0x1]
    %v695 = vsel %vm109, %v690, -inf
    %v696 = vrot.slane %v695, 4
    %v697 = vmax.f32 %v695, %v696
    %v698 = vrot.slane %v697, 2
    %v699 = vmax.f32 %v697, %v698
    %v700 = vrot.slane %v699, 1
    %v701 = vmax.f32 %v699, %v700
    %v702 = vsub.f32 %v690, %v701
    %v703 = vmul.f32 %v702, 1.442695
    %v704 = vpow.pop %v703
    %705 = vmatpush.msra.mxu0 0.0
    %706 = vmatpush.msra.mxu0 0.0
    %707 = vmatpush.msra.mxu0 0.0
    %708 = vmatpush.msra.mxu0 0.0
    %709 = vmatpush.msra.mxu0 0.0
    %710 = vmatpush.msra.mxu0 0.0
    %711 = vmatpush.msra.mxu0 0.0
    %712 = vmatpush.msra.mxu0 0.0
    %713 = vmatpush.msra.mxu0 0.0
    %714 = vmatpush.msra.mxu0 0.0
    %715 = vmatpush.msra.mxu0 0.0
    %716 = vmatpush.msra.mxu0 0.0
    %717 = vmatpush.msra.mxu0 0.0
    %718 = vmatpush.msra.mxu0 0.0
    %719 = vmatpush.msra.mxu0 0.0
    %720 = vmatpush.msra.mxu0 %v704
    %721 = vmatmul.f32.gmra.mxu0 %v609
    %v722 = vpop.f32.mrf.mxu0
    %v723 = vadd.f32 0.0, %v722
    %724 = vdwg.mxu0
    %v725 = vlog2.pop %v723
    %v726 = vmul.f32 %v725, 0.6931472
    %v727 = vadd.f32 %v726, %v701
    %v728 = vadd.f32 %v727, %v638
    %vm729 = vcmp.gt.f32.partialorder %v694, 0.0
    %v730 = vadd.f32 %v728, %v692
    %v731 = vsel %vm729, 1, 0
    %v732 = vperm.slane %v731, 0
    %vm733 = vcmp.eq.s32.totalorder %v732, 1
    %v734 = vsel %vm733, %v730, %v690
    %s735 = scalar_lea.vmem %s0, 24
    %v736 = vld [vmem:[%s735] sm:$0xff]
    %s737 = scalar_lea.vmem %s2, 3
    %v738 = vld [vmem:[%s737] sm:$0x1]
    %v739 = vsel %vm109, %v734, -inf
    %v740 = vrot.slane %v739, 4
    %v741 = vmax.f32 %v739, %v740
    %v742 = vrot.slane %v741, 2
    %v743 = vmax.f32 %v741, %v742
    %v744 = vrot.slane %v743, 1
    %v745 = vmax.f32 %v743, %v744
    %v746 = vsub.f32 %v734, %v745
    %v747 = vmul.f32 %v746, 1.442695
    %v748 = vpow.pop %v747
    %749 = vmatpush.msra.mxu0 0.0
    %750 = vmatpush.msra.mxu0 0.0
    %751 = vmatpush.msra.mxu0 0.0
    %752 = vmatpush.msra.mxu0 0.0
    %753 = vmatpush.msra.mxu0 0.0
    %754 = vmatpush.msra.mxu0 0.0
    %755 = vmatpush.msra.mxu0 0.0
    %756 = vmatpush.msra.mxu0 0.0
    %757 = vmatpush.msra.mxu0 0.0
    %758 = vmatpush.msra.mxu0 0.0
    %759 = vmatpush.msra.mxu0 0.0
    %760 = vmatpush.msra.mxu0 0.0
    %761 = vmatpush.msra.mxu0 0.0
    %762 = vmatpush.msra.mxu0 0.0
    %763 = vmatpush.msra.mxu0 0.0
    %764 = vmatpush.msra.mxu0 %v748
    %765 = vmatmul.f32.gmra.mxu0 %v609
    %v766 = vpop.f32.mrf.mxu0
    %v767 = vadd.f32 0.0, %v766
    %768 = vdwg.mxu0
    %v769 = vlog2.pop %v767
    %v770 = vmul.f32 %v769, 0.6931472
    %v771 = vadd.f32 %v770, %v745
    %v772 = vadd.f32 %v771, %v638
    %vm773 = vcmp.gt.f32.partialorder %v738, 0.0
    %v774 = vadd.f32 %v772, %v736
    %v775 = vsel %vm773, 1, 0
    %v776 = vperm.slane %v775, 0
    %vm777 = vcmp.eq.s32.totalorder %v776, 1
    %v778 = vsel %vm777, %v774, %v734
    %s779 = scalar_lea.vmem %s0, 32
    %v780 = vld [vmem:[%s779] sm:$0xff]
    %s781 = scalar_lea.vmem %s2, 4
    %v782 = vld [vmem:[%s781] sm:$0x1]
    %v783 = vsel %vm109, %v778, -inf
    %v784 = vrot.slane %v783, 4
    %v785 = vmax.f32 %v783, %v784
    %v786 = vrot.slane %v785, 2
    %v787 = vmax.f32 %v785, %v786
    %v788 = vrot.slane %v787, 1
    %v789 = vmax.f32 %v787, %v788
    %v790 = vsub.f32 %v778, %v789
    %v791 = vmul.f32 %v790, 1.442695
    %v792 = vpow.pop %v791
    %793 = vmatpush.msra.mxu0 0.0
    %794 = vmatpush.msra.mxu0 0.0
    %795 = vmatpush.msra.mxu0 0.0
    %796 = vmatpush.msra.mxu0 0.0
    %797 = vmatpush.msra.mxu0 0.0
    %798 = vmatpush.msra.mxu0 0.0
    %799 = vmatpush.msra.mxu0 0.0
    %800 = vmatpush.msra.mxu0 0.0
    %801 = vmatpush.msra.mxu0 0.0
    %802 = vmatpush.msra.mxu0 0.0
    %803 = vmatpush.msra.mxu0 0.0
    %804 = vmatpush.msra.mxu0 0.0
    %805 = vmatpush.msra.mxu0 0.0
    %806 = vmatpush.msra.mxu0 0.0
    %807 = vmatpush.msra.mxu0 0.0
    %808 = vmatpush.msra.mxu0 %v792
    %809 = vmatmul.f32.gmra.mxu0 %v609
    %v810 = vpop.f32.mrf.mxu0
    %v811 = vadd.f32 0.0, %v810
    %812 = vdwg.mxu0
    %v813 = vlog2.pop %v811
    %v814 = vmul.f32 %v813, 0.6931472
    %v815 = vadd.f32 %v814, %v789
    %v816 = vadd.f32 %v815, %v638
    %vm817 = vcmp.gt.f32.partialorder %v782, 0.0
    %v818 = vadd.f32 %v816, %v780
    %v819 = vsel %vm817, 1, 0
    %v820 = vperm.slane %v819, 0
    %vm821 = vcmp.eq.s32.totalorder %v820, 1
    %v822 = vsel %vm821, %v818, %v778
    %s823 = scalar_lea.vmem %s0, 40
    %v824 = vld [vmem:[%s823] sm:$0xff]
    %s825 = scalar_lea.vmem %s2, 5
    %v826 = vld [vmem:[%s825] sm:$0x1]
    %v827 = vsel %vm109, %v822, -inf
    %v828 = vrot.slane %v827, 4
    %v829 = vmax.f32 %v827, %v828
    %v830 = vrot.slane %v829, 2
    %v831 = vmax.f32 %v829, %v830
    %v832 = vrot.slane %v831, 1
    %v833 = vmax.f32 %v831, %v832
    %v834 = vsub.f32 %v822, %v833
    %v835 = vmul.f32 %v834, 1.442695
    %v836 = vpow.pop %v835
    %837 = vmatpush.msra.mxu0 0.0
    %838 = vmatpush.msra.mxu0 0.0
    %839 = vmatpush.msra.mxu0 0.0
    %840 = vmatpush.msra.mxu0 0.0
    %841 = vmatpush.msra.mxu0 0.0
    %842 = vmatpush.msra.mxu0 0.0
    %843 = vmatpush.msra.mxu0 0.0
    %844 = vmatpush.msra.mxu0 0.0
    %845 = vmatpush.msra.mxu0 0.0
    %846 = vmatpush.msra.mxu0 0.0
    %847 = vmatpush.msra.mxu0 0.0
    %848 = vmatpush.msra.mxu0 0.0
    %849 = vmatpush.msra.mxu0 0.0
    %850 = vmatpush.msra.mxu0 0.0
    %851 = vmatpush.msra.mxu0 0.0
    %852 = vmatpush.msra.mxu0 %v836
    %853 = vmatmul.f32.gmra.mxu0 %v609
    %v854 = vpop.f32.mrf.mxu0
    %v855 = vadd.f32 0.0, %v854
    %856 = vdwg.mxu0
    %v857 = vlog2.pop %v855
    %v858 = vmul.f32 %v857, 0.6931472
    %v859 = vadd.f32 %v858, %v833
    %v860 = vadd.f32 %v859, %v638
    %vm861 = vcmp.gt.f32.partialorder %v826, 0.0
    %v862 = vadd.f32 %v860, %v824
    %v863 = vsel %vm861, 1, 0
    %v864 = vperm.slane %v863, 0
    %vm865 = vcmp.eq.s32.totalorder %v864, 1
    %v866 = vsel %vm865, %v862, %v822
    %s867 = scalar_lea.vmem %s0, 48
    %v868 = vld [vmem:[%s867] sm:$0xff]
    %s869 = scalar_lea.vmem %s2, 6
    %v870 = vld [vmem:[%s869] sm:$0x1]
    %v871 = vsel %vm109, %v866, -inf
    %v872 = vrot.slane %v871, 4
    %v873 = vmax.f32 %v871, %v872
    %v874 = vrot.slane %v873, 2
    %v875 = vmax.f32 %v873, %v874
    %v876 = vrot.slane %v875, 1
    %v877 = vmax.f32 %v875, %v876
    %v878 = vsub.f32 %v866, %v877
    %v879 = vmul.f32 %v878, 1.442695
    %v880 = vpow.pop %v879
    %881 = vmatpush.msra.mxu0 0.0
    %882 = vmatpush.msra.mxu0 0.0
    %883 = vmatpush.msra.mxu0 0.0
    %884 = vmatpush.msra.mxu0 0.0
    %885 = vmatpush.msra.mxu0 0.0
    %886 = vmatpush.msra.mxu0 0.0
    %887 = vmatpush.msra.mxu0 0.0
    %888 = vmatpush.msra.mxu0 0.0
    %889 = vmatpush.msra.mxu0 0.0
    %890 = vmatpush.msra.mxu0 0.0
    %891 = vmatpush.msra.mxu0 0.0
    %892 = vmatpush.msra.mxu0 0.0
    %893 = vmatpush.msra.mxu0 0.0
    %894 = vmatpush.msra.mxu0 0.0
    %895 = vmatpush.msra.mxu0 0.0
    %896 = vmatpush.msra.mxu0 %v880
    %897 = vmatmul.f32.gmra.mxu0 %v609
    %v898 = vpop.f32.mrf.mxu0
    %v899 = vadd.f32 0.0, %v898
    %900 = vdwg.mxu0
    %v901 = vlog2.pop %v899
    %v902 = vmul.f32 %v901, 0.6931472
    %v903 = vadd.f32 %v902, %v877
    %v904 = vadd.f32 %v903, %v638
    %vm905 = vcmp.gt.f32.partialorder %v870, 0.0
    %v906 = vadd.f32 %v904, %v868
    %v907 = vsel %vm905, 1, 0
    %v908 = vperm.slane %v907, 0
    %vm909 = vcmp.eq.s32.totalorder %v908, 1
    %v910 = vsel %vm909, %v906, %v866
    %s911 = scalar_lea.vmem %s0, 56
    %v912 = vld [vmem:[%s911] sm:$0xff]
    %s913 = scalar_lea.vmem %s2, 7
    %v914 = vld [vmem:[%s913] sm:$0x1]
    %v915 = vsel %vm109, %v910, -inf
    %v916 = vrot.slane %v915, 4
    %v917 = vmax.f32 %v915, %v916
    %v918 = vrot.slane %v917, 2
    %v919 = vmax.f32 %v917, %v918
    %v920 = vrot.slane %v919, 1
    %v921 = vmax.f32 %v919, %v920
    %v922 = vsub.f32 %v910, %v921
    %v923 = vmul.f32 %v922, 1.442695
    %v924 = vpow.pop %v923
    %925 = vmatpush.msra.mxu0 0.0
    %926 = vmatpush.msra.mxu0 0.0
    %927 = vmatpush.msra.mxu0 0.0
    %928 = vmatpush.msra.mxu0 0.0
    %929 = vmatpush.msra.mxu0 0.0
    %930 = vmatpush.msra.mxu0 0.0
    %931 = vmatpush.msra.mxu0 0.0
    %932 = vmatpush.msra.mxu0 0.0
    %933 = vmatpush.msra.mxu0 0.0
    %934 = vmatpush.msra.mxu0 0.0
    %935 = vmatpush.msra.mxu0 0.0
    %936 = vmatpush.msra.mxu0 0.0
    %937 = vmatpush.msra.mxu0 0.0
    %938 = vmatpush.msra.mxu0 0.0
    %939 = vmatpush.msra.mxu0 0.0
    %940 = vmatpush.msra.mxu0 %v924
    %941 = vmatmul.f32.gmra.mxu0 %v609
    %v942 = vpop.f32.mrf.mxu0
    %v943 = vadd.f32 0.0, %v942
    %944 = vdwg.mxu0
    %v945 = vlog2.pop %v943
    %v946 = vmul.f32 %v945, 0.6931472
    %v947 = vadd.f32 %v946, %v921
    %v948 = vadd.f32 %v947, %v638
    %vm949 = vcmp.gt.f32.partialorder %v914, 0.0
    %v950 = vadd.f32 %v948, %v912
    %v951 = vsel %vm949, 1, 0
    %v952 = vperm.slane %v951, 0
    %vm953 = vcmp.eq.s32.totalorder %v952, 1
    %v954 = vsel %vm953, %v950, %v910
    %955 = vst.msk [vmem:[#allocation2] sm:$0xff] %vm109, %v954
    // Predicated region
    $region38: #{tpu_custom_call.1} parent=1 // pred_check
      %p956 = pneg %p59
    $region39: #{tpu_custom_call.1} parent=1 // pred_check_branch
      %958 = sbr.rel (%p956) target = $region41
    $region40: #{tpu_custom_call.1} parent=1 // pred_region
      %v959 = vld [vmem:[%s7] sm:$0xff]
      %961 = vset.pattern.permute.xlu0 0
      %962 = vperm.xlu0 %961, %v959
      %v963 = vpop.permute.xlu0 %962
      %v965 = vadd.f32 %v954, %v963
      %v966 = vsel %vm109, %v965, -inf
      %v967 = vrot.slane %v966, 4
      %v968 = vmax.f32 %v966, %v967
      %v969 = vrot.slane %v968, 2
      %v970 = vmax.f32 %v968, %v969
      %v971 = vrot.slane %v970, 1
      %v972 = vmax.f32 %v970, %v971
      %v973 = vsub.f32 %v965, %v972
      %v974 = vmul.f32 %v973, 1.442695
      %v975 = vpow.pop %v974
      %v976 = vsel %vm109, %v975, 0.0
      %v977 = vrot.slane %v976, 4
      %v978 = vadd.f32 %v976, %v977
      %v979 = vrot.slane %v978, 2
      %v980 = vadd.f32 %v978, %v979
      %v981 = vrot.slane %v980, 1
      %v982 = vadd.f32 %v980, %v981
      %v983 = vlog2.pop %v982
      %v984 = vmul.f32 %v983, 0.6931472
      %v985 = vadd.f32 %v984, %v972
      %v986 = vld [vmem:[#allocation3] sm:$0x1]
      %v987 = vsub.f32 %v985, %v986
      %988 = vst.msk [vmem:[#allocation6] sm:$0x1] %vm174, %v987
    $region41: #{tpu_custom_call.1} parent=1 // pred_fallthru
      _
    // Predicated region
    $region42: #{tpu_custom_call.1} parent=1 // pred_check
      _
    $region43: #{tpu_custom_call.1} parent=1 // pred_check_branch
      %990 = sbr.rel (0) target = $region45
    $region44: #{tpu_custom_call.1} parent=1 // pred_region
      %992 = vsyncadd [#allocation7], 0
      %s994 = sshll.u32 [#allocation6], 4
      %s995 = int_to_ptr.vmem [resolvable:$true] %s994
      %s996 = sshll.u32 %s8, 4
      %s997 = int_to_ptr.hbm [resolvable:$true] %s996
      %999 = dma.vmem_to_hbm [thread:$0]  %s995, 16, %s997, [#allocation7]
    $region45: #{tpu_custom_call.1} parent=1 // pred_fallthru
      _
    // Predicated region
    $region46: #{tpu_custom_call.1} parent=1 // pred_check
      _
    $region47: #{tpu_custom_call.1} parent=1 // pred_check_branch
      %1001 = sbr.rel (0) target = $region49
    $region48: #{tpu_custom_call.1} parent=1 // pred_region
      %1003 = dma.done [#allocation7], 16
    $region49: #{tpu_custom_call.1} parent=1 // pred_fallthru
      _
    %1004 = vsyncpa [#allocation7], 1

</llo_original>
